<compile_context>
chip_gen: v5e
topology: v5e:2x2
jax: 0.10.0
libtpu: 0.0.40
codegen_flags: <defaults>
</compile_context>

<pallas_src>
import functools
import math

import jax
import jax.numpy as jnp
from jax.experimental import pallas as pl
from jax.experimental.pallas import tpu as pltpu

BN_EPS = 1e-5


# ---------------------------------------------------------------------------
# Helpers
# ---------------------------------------------------------------------------
def _bn_scale_shift(y, gamma, beta, apply_relu):
    """Training-mode BatchNorm1d over the batch axis, folded into one scale/shift.

    y: (B, T) f32; gamma/beta: (1, T) f32.  All math stays f32 (no bf16 VPU on v5e).
    """
    m = jnp.mean(y, axis=0, keepdims=True)
    m2 = jnp.mean(y * y, axis=0, keepdims=True)
    var = jnp.maximum(m2 - m * m, 0.0)          # one-pass variance, clamped
    scale = jax.lax.rsqrt(var + BN_EPS) * gamma
    shift = beta - m * scale
    h = y * scale + shift                        # 2 full-(B,T) VPU passes
    return jnp.maximum(h, 0.0) if apply_relu else h


def _pick_tile_n(n):
    """Largest output-feature tile (multiple of 128, capped at 512) dividing n, preferring
    >= 2 tiles so a parallel feature axis can feed both v7x TensorCores."""
    for cand in (512, 384, 256, 128):
        if n % cand == 0 and n // cand >= 2:
            return cand
    for cand in (512, 384, 256, 128):
        if n % cand == 0:
            return cand
    return n  # TODO(synk): pad/ragged handling if N is not a multiple of 128


def _buffered_spec(shape, index_map, nbuf):
    """Weight column tile BlockSpec with nbuf-deep multi-buffering; falls back to the
    default double-buffering if this JAX build lacks pipeline_mode/Buffered."""
    buffered = getattr(pl, "Buffered", None)
    if buffered is not None:
        try:
            return pl.BlockSpec(shape, index_map, pipeline_mode=buffered(nbuf))
        except TypeError:
            pass
    return pl.BlockSpec(shape, index_map)


def _vmem_limit(est_bytes):
    # 2x headroom, clamped to [8 MiB, 32 MiB]: stays within half of v7x's 64 MiB/TC VMEM
    # (and the scoped default on v5e/v6e) while leaving room for surrounding XLA fusions.
    return int(min(max(2 * est_bytes, 8 << 20), 32 << 20))


# ---------------------------------------------------------------------------
# Fused three-layer kernel (primary path for shapes whose weights fit VMEM)
# ---------------------------------------------------------------------------
def _projection_fused_kernel(x_ref, w1_ref, gb1_ref, w2_ref, gb2_ref, w3_ref, gb3_ref,
                             o_ref, h2_ref, *, tile_n):
    """x/w*: bf16; gb*: (8, F) f32 with row0=gamma, row1=beta; o: f32; h2: bf16 scratch."""
    j = pl.program_id(0)

    # Layers 1 and 2 run once; their bf16 result stays resident in VMEM scratch.
    @pl.when(j == 0)
    def _():
        y1 = jnp.dot(x_ref[...], w1_ref[...], preferred_element_type=jnp.float32)
        h1 = _bn_scale_shift(y1, gb1_ref[0:1, :], gb1_ref[1:2, :], True)
        y2 = jnp.dot(h1.astype(jnp.bfloat16), w2_ref[...],
                     preferred_element_type=jnp.float32)
        h2 = _bn_scale_shift(y2, gb2_ref[0:1, :], gb2_ref[1:2, :], True)
        h2_ref[...] = h2.astype(h2_ref.dtype)

    # Layer 3: one output-feature tile per grid step (w3 column tile pipelined).
    y3 = jnp.dot(h2_ref[...], w3_ref[...], preferred_element_type=jnp.float32)
    c0 = pl.multiple_of(j * tile_n, 128)
    gamma = gb3_ref[0:1, pl.ds(c0, tile_n)]
    beta = gb3_ref[1:2, pl.ds(c0, tile_n)]
    o_ref[...] = _bn_scale_shift(y3, gamma, beta, False).astype(o_ref.dtype)


def _projection_fused(x_bf, w1, gb1, w2, gb2, w3, gb3, *, tile_n):
    B, in_dim = x_bf.shape
    hsz = w1.shape[1]
    out_dim = w3.shape[1]
    ntiles = out_dim // tile_n
    wbuf = min(3, max(2, ntiles))

    kernel = functools.partial(_projection_fused_kernel, tile_n=tile_n)

    flops = 2 * B * (in_dim * hsz + hsz * hsz + hsz * out_dim) + 8 * B * (2 * hsz + out_dim)
    bytes_accessed = (B * in_dim * 2 + (in_dim * hsz + hsz * hsz + hsz * out_dim) * 2
                      + 8 * (2 * hsz + out_dim) * 4 + B * out_dim * 4)
    cost = pl.CostEstimate(flops=flops, transcendentals=2 * hsz + out_dim,
                           bytes_accessed=bytes_accessed)

    vmem_est = (B * in_dim * 2                       # resident x (bf16)
                + 2 * (in_dim * hsz + hsz * hsz) * 2  # resident w1,w2 (allow 2x alloc)
                + wbuf * hsz * tile_n * 2             # pipelined w3 tiles
                + 8 * (2 * hsz + out_dim) * 4         # resident gamma/beta slabs
                + 2 * B * tile_n * 4                  # double-buffered f32 output tile
                + B * hsz * 2)                        # h2 scratch (bf16)

    return pl.pallas_call(
        kernel,
        out_shape=jax.ShapeDtypeStruct((B, out_dim), jnp.float32),
        grid_spec=pltpu.PrefetchScalarGridSpec(
            num_scalar_prefetch=0,
            grid=(ntiles,),
            in_specs=[
                pl.BlockSpec((B, in_dim), lambda j: (0, 0)),    # x, resident
                pl.BlockSpec((in_dim, hsz), lambda j: (0, 0)),  # w1, resident
                pl.BlockSpec((8, hsz), lambda j: (0, 0)),       # gamma/beta 1, resident
                pl.BlockSpec((hsz, hsz), lambda j: (0, 0)),     # w2, resident
                pl.BlockSpec((8, hsz), lambda j: (0, 0)),       # gamma/beta 2, resident
                _buffered_spec((hsz, tile_n), lambda j: (0, j), wbuf),  # w3 column tile
                pl.BlockSpec((8, out_dim), lambda j: (0, 0)),   # gamma/beta 3, resident
            ],
            out_specs=pl.BlockSpec((B, tile_n), lambda j: (0, j)),
            scratch_shapes=[pltpu.VMEM((B, hsz), jnp.bfloat16)],
        ),
        compiler_params=pltpu.CompilerParams(
            # h2 scratch written at j==0 is consumed by every step -> serial axis.
            dimension_semantics=("arbitrary",),
            vmem_limit_bytes=_vmem_limit(vmem_est),
        ),
        cost_estimate=cost,
    )(x_bf, w1, gb1, w2, gb2, w3, gb3)


# ---------------------------------------------------------------------------
# Per-layer tiled kernel (fallback for dims whose weights do not fit VMEM)
# ---------------------------------------------------------------------------
def _linear_bn_kernel(x_ref, w_ref, gb_ref, o_ref, *, apply_relu, tile_n):
    """x: (B,K) bf16 resident; w: (K,TN) bf16 tile; gb: (8,N) f32 resident; o: (B,TN)."""
    j = pl.program_id(0)
    y = jnp.dot(x_ref[...], w_ref[...], preferred_element_type=jnp.float32)
    c0 = pl.multiple_of(j * tile_n, 128)
    gamma = gb_ref[0:1, pl.ds(c0, tile_n)]
    beta = gb_ref[1:2, pl.ds(c0, tile_n)]
    o_ref[...] = _bn_scale_shift(y, gamma, beta, apply_relu).astype(o_ref.dtype)


def _linear_bn(x_bf, w, gb, *, apply_relu, out_dtype):
    B, K = x_bf.shape
    Kw, N = w.shape
    assert K == Kw
    tile_n = _pick_tile_n(N)
    ntiles = N // tile_n
    wbuf = min(3, max(2, ntiles))
    out_bytes = jnp.dtype(out_dtype).itemsize

    kernel = functools.partial(_linear_bn_kernel, apply_relu=apply_relu, tile_n=tile_n)

    flops = 2 * B * K * N + 8 * B * N
    bytes_accessed = B * K * 2 + K * N * 2 + 8 * N * 4 + B * N * out_bytes
    cost = pl.CostEstimate(flops=flops, transcendentals=N, bytes_accessed=bytes_accessed)

    vmem_est = (B * K * 2 + 8 * N * 4
                + wbuf * K * tile_n * 2 + 2 * B * tile_n * out_bytes)

    return pl.pallas_call(
        kernel,
        out_shape=jax.ShapeDtypeStruct((B, N), out_dtype),
        grid_spec=pltpu.PrefetchScalarGridSpec(
            num_scalar_prefetch=0,
            grid=(ntiles,),
            in_specs=[
                pl.BlockSpec((B, K), lambda j: (0, 0)),               # bf16 input, resident
                _buffered_spec((K, tile_n), lambda j: (0, j), wbuf),  # weight column tile
                pl.BlockSpec((8, N), lambda j: (0, 0)),               # gamma/beta, resident
            ],
            out_specs=pl.BlockSpec((B, tile_n), lambda j: (0, j)),
        ),
        compiler_params=pltpu.CompilerParams(
            dimension_semantics=("parallel",),   # independent feature tiles -> v7x dual-TC
            vmem_limit_bytes=_vmem_limit(vmem_est),
        ),
        cost_estimate=cost,
    )(x_bf, w, gb)


# ---------------------------------------------------------------------------
# Projection forward
# ---------------------------------------------------------------------------
def projection_forward(x, params):
    (w1, gb1), (w2, gb2), (w3, gb3) = params
    B, in_dim = x.shape
    hsz = w1.shape[1]
    out_dim = w3.shape[1]
    assert B % 8 == 0 and in_dim % 128 == 0 and hsz % 128 == 0 and out_dim % 128 == 0

    x_bf = x.astype(jnp.bfloat16)   # cast once in the wrapper, never per grid step

    tile_n = _pick_tile_n(out_dim)
    fused_est = (B * in_dim * 2 + 2 * (in_dim * hsz + hsz * hsz) * 2
                 + 3 * hsz * tile_n * 2 + 8 * (2 * hsz + out_dim) * 4
                 + 2 * B * tile_n * 4 + B * hsz * 2)
    if fused_est <= (28 << 20):
        # Single pallas_call: no HBM round trip for the (B, hsz) intermediates.
        return _projection_fused(x_bf, w1, gb1, w2, gb2, w3, gb3, tile_n=tile_n)

    # Fallback: one call per layer; bf16 activations between layers, f32 final output.
    h = _linear_bn(x_bf, w1, gb1, apply_relu=True, out_dtype=jnp.bfloat16)
    h = _linear_bn(h, w2, gb2, apply_relu=True, out_dtype=jnp.bfloat16)
    return _linear_bn(h, w3, gb3, apply_relu=False, out_dtype=jnp.float32)


# ---------------------------------------------------------------------------
# Parameters & reference
# ---------------------------------------------------------------------------
def _pack_gamma_beta(gamma, beta):
    f = gamma.shape[-1]
    gb = jnp.zeros((8, f), jnp.float32)
    return gb.at[0, :].set(gamma).at[1, :].set(beta)


def init_projection_params(key, in_dim, hsz, out_dim):
    # Linear weights: PyTorch default uniform(+/- 1/sqrt(fan_in)), stored pre-transposed
    # [in, out] and cast to bf16 (MXU operand dtype).  Linear biases omitted: exactly
    # cancelled by training-mode BatchNorm1d's batch-mean subtraction.
    # BatchNorm affine: gamma=1, beta=0 (PyTorch default), packed as rows 0/1 of (8, F).
    dims = [(in_dim, hsz), (hsz, hsz), (hsz, out_dim)]
    keys = jax.random.split(key, 3)
    params = []
    for k, (fi, fo) in zip(keys, dims):
        bound = 1.0 / math.sqrt(fi)
        w = jax.random.uniform(k, (fi, fo), jnp.float32, -bound, bound).astype(jnp.bfloat16)
        gb = _pack_gamma_beta(jnp.ones((fo,), jnp.float32), jnp.zeros((fo,), jnp.float32))
        params.append((w, gb))
    return tuple(params)


def _ref_forward(x, params):
    # Pure-JAX reference with the same numerics (bf16 matmul operands, f32 BN math,
    # bf16 activations between layers).
    def layer(h, w, gb, relu):
        y = jnp.dot(h.astype(jnp.bfloat16), w, preferred_element_type=jnp.float32)
        m = jnp.mean(y, axis=0, keepdims=True)
        var = jnp.maximum(jnp.mean(y * y, axis=0, keepdims=True) - m * m, 0.0)
        scale = jax.lax.rsqrt(var + BN_EPS) * gb[0:1, :]
        o = y * scale + (gb[1:2, :] - m * scale)
        return jnp.maximum(o, 0.0) if relu else o

    (w1, gb1), (w2, gb2), (w3, gb3) = params
    h = layer(x, w1, gb1, True).astype(jnp.bfloat16)
    h = layer(h, w2, gb2, True).astype(jnp.bfloat16)
    return layer(h, w3, gb3, False)


if __name__ == "__main__":
    # Small but MXU/tiling-friendly shapes: batch 128 fills the MXU M dim on v5e
    # (half-fills v6e/v7x), hidden/out 256 so the fused path gets 2 feature tiles.
    B, IN_DIM, HSZ, OUT_DIM = 128, 128, 256, 256

    key = jax.random.PRNGKey(0)
    kx, kp = jax.random.split(key)
    x = jax.random.normal(kx, (B, IN_DIM), jnp.float32)
    params = init_projection_params(kp, IN_DIM, HSZ, OUT_DIM)

    fwd = jax.jit(projection_forward)
    out = fwd(x, params)
    jax.block_until_ready(out)

    assert out.shape == (B, OUT_DIM)
    assert bool(jnp.all(jnp.isfinite(out)))

    ref = _ref_forward(x, params)
    max_err = float(jnp.max(jnp.abs(out - ref)))
    assert bool(jnp.allclose(out, ref, rtol=2e-2, atol=2e-2)), max_err

    # Also exercise the tiled per-layer fallback path so it stays correct.
    xb = x.astype(jnp.bfloat16)
    h = _linear_bn(xb, params[0][0], params[0][1], apply_relu=True, out_dtype=jnp.bfloat16)
    h = _linear_bn(h, params[1][0], params[1][1], apply_relu=True, out_dtype=jnp.bfloat16)
    out2 = _linear_bn(h, params[2][0], params[2][1], apply_relu=False, out_dtype=jnp.float32)
    jax.block_until_ready(out2)
    max_err2 = float(jnp.max(jnp.abs(out2 - ref)))
    assert bool(jnp.allclose(out2, ref, rtol=2e-2, atol=2e-2)), max_err2

    print("KERNEL_OK")
</pallas_src>

<mosaic_0001>
module attributes {stable_mosaic.version = 11 : i64} {
  func.func @_projection_fused_kernel(%arg0: i32, %arg1: memref<128x128xbf16, #tpu.memory_space<vmem>>, %arg2: memref<128x256xbf16, #tpu.memory_space<vmem>>, %arg3: memref<8x256xf32, #tpu.memory_space<vmem>>, %arg4: memref<256x256xbf16, #tpu.memory_space<vmem>>, %arg5: memref<8x256xf32, #tpu.memory_space<vmem>>, %arg6: memref<256x128xbf16, #tpu.memory_space<vmem>>, %arg7: memref<8x256xf32, #tpu.memory_space<vmem>>, %arg8: memref<128x128xf32, #tpu.memory_space<vmem>>, %arg9: memref<128x256xbf16, #tpu.memory_space<vmem>>) attributes {dimension_semantics = [#tpu.dimension_semantics<arbitrary>], iteration_bounds = array<i64: 2>, scalar_prefetch = 0 : i64, scratch_operands = 1 : i64, tpu.core_type = #tpu.core_type<tc>, window_params = [{pipeline_mode = #tpu.pipeline_mode<synchronous>, transform_indices = @transform_0, window_bounds = array<i64: 128, 128>}, {pipeline_mode = #tpu.pipeline_mode<synchronous>, transform_indices = @transform_1, window_bounds = array<i64: 128, 256>}, {pipeline_mode = #tpu.pipeline_mode<synchronous>, transform_indices = @transform_2, window_bounds = array<i64: 8, 256>}, {pipeline_mode = #tpu.pipeline_mode<synchronous>, transform_indices = @transform_3, window_bounds = array<i64: 256, 256>}, {pipeline_mode = #tpu.pipeline_mode<synchronous>, transform_indices = @transform_4, window_bounds = array<i64: 8, 256>}, {pipeline_mode = #tpu.pipeline_mode<double_buffered>, transform_indices = @transform_5, window_bounds = array<i64: 256, 128>}, {pipeline_mode = #tpu.pipeline_mode<synchronous>, transform_indices = @transform_6, window_bounds = array<i64: 8, 256>}, {transform_indices = @transform_7, window_bounds = array<i64: 128, 128>}]} {
    %c0_i32 = arith.constant 0 : i32
    %0 = arith.cmpi eq, %arg0, %c0_i32 : i32
    %1 = arith.extui %0 : i1 to i32
    %c0_i32_0 = arith.constant 0 : i32
    %2 = arith.cmpi ne, %1, %c0_i32_0 : i32
    scf.if %2 {
      %c0_13 = arith.constant 0 : index
      %c0_14 = arith.constant 0 : index
      %36 = vector.load %arg1[%c0_13, %c0_14] : memref<128x128xbf16, #tpu.memory_space<vmem>>, vector<128x128xbf16>
      %c0_15 = arith.constant 0 : index
      %c0_16 = arith.constant 0 : index
      %37 = vector.load %arg2[%c0_15, %c0_16] : memref<128x256xbf16, #tpu.memory_space<vmem>>, vector<128x256xbf16>
      %cst_17 = arith.constant dense<0.000000e+00> : vector<128x256xf32>
      %38 = tpu.matmul %36, %37, %cst_17 {dimension_numbers = #tpu.dot_dimension_numbers<[1], [0], [0], [1], [0, 0, 1, 1], [], []>} : vector<128x128xbf16>, vector<128x256xbf16>, vector<128x256xf32> -> vector<128x256xf32>
      %c0_18 = arith.constant 0 : index
      %c0_19 = arith.constant 0 : index
      %39 = vector.load %arg3[%c0_18, %c0_19] : memref<8x256xf32, #tpu.memory_space<vmem>>, vector<1x256xf32>
      %c1_20 = arith.constant 1 : index
      %c0_21 = arith.constant 0 : index
      %40 = vector.load %arg3[%c1_20, %c0_21] : memref<8x256xf32, #tpu.memory_space<vmem>>, vector<1x256xf32>
      %cst_22 = arith.constant dense<0.000000e+00> : vector<256xf32>
      %41 = vector.multi_reduction <add>, %38, %cst_22 [0] : vector<128x256xf32> to vector<256xf32>
      %42 = vector.shape_cast %41 : vector<256xf32> to vector<1x256xf32>
      %cst_23 = arith.constant 1.280000e+02 : f32
      %43 = vector.broadcast %cst_23 : f32 to vector<1x256xf32>
      %44 = arith.divf %42, %43 : vector<1x256xf32>
      %45 = arith.mulf %38, %38 : vector<128x256xf32>
      %cst_24 = arith.constant dense<0.000000e+00> : vector<256xf32>
      %46 = vector.multi_reduction <add>, %45, %cst_24 [0] : vector<128x256xf32> to vector<256xf32>
      %47 = vector.shape_cast %46 : vector<256xf32> to vector<1x256xf32>
      %cst_25 = arith.constant 1.280000e+02 : f32
      %48 = vector.broadcast %cst_25 : f32 to vector<1x256xf32>
      %49 = arith.divf %47, %48 : vector<1x256xf32>
      %50 = arith.mulf %44, %44 : vector<1x256xf32>
      %51 = arith.subf %49, %50 : vector<1x256xf32>
      %cst_26 = arith.constant 0.000000e+00 : f32
      %52 = vector.broadcast %cst_26 : f32 to vector<1x256xf32>
      %53 = arith.maximumf %51, %52 : vector<1x256xf32>
      %cst_27 = arith.constant 9.99999974E-6 : f32
      %54 = vector.broadcast %cst_27 : f32 to vector<1x256xf32>
      %55 = arith.addf %53, %54 : vector<1x256xf32>
      %56 = math.rsqrt %55 : vector<1x256xf32>
      %57 = arith.mulf %56, %39 : vector<1x256xf32>
      %58 = arith.mulf %44, %57 : vector<1x256xf32>
      %59 = arith.subf %40, %58 : vector<1x256xf32>
      %60 = vector.broadcast %57 : vector<1x256xf32> to vector<128x256xf32>
      %61 = arith.mulf %38, %60 : vector<128x256xf32>
      %62 = vector.broadcast %59 : vector<1x256xf32> to vector<128x256xf32>
      %63 = arith.addf %61, %62 : vector<128x256xf32>
      %cst_28 = arith.constant 0.000000e+00 : f32
      %64 = vector.broadcast %cst_28 : f32 to vector<128x256xf32>
      %65 = arith.maximumf %63, %64 : vector<128x256xf32>
      %66 = arith.truncf %65 : vector<128x256xf32> to vector<128x256xbf16>
      %c0_29 = arith.constant 0 : index
      %c0_30 = arith.constant 0 : index
      %67 = vector.load %arg4[%c0_29, %c0_30] : memref<256x256xbf16, #tpu.memory_space<vmem>>, vector<256x256xbf16>
      %cst_31 = arith.constant dense<0.000000e+00> : vector<128x256xf32>
      %68 = tpu.matmul %66, %67, %cst_31 {dimension_numbers = #tpu.dot_dimension_numbers<[1], [0], [0], [1], [0, 0, 1, 1], [], []>} : vector<128x256xbf16>, vector<256x256xbf16>, vector<128x256xf32> -> vector<128x256xf32>
      %c0_32 = arith.constant 0 : index
      %c0_33 = arith.constant 0 : index
      %69 = vector.load %arg5[%c0_32, %c0_33] : memref<8x256xf32, #tpu.memory_space<vmem>>, vector<1x256xf32>
      %c1_34 = arith.constant 1 : index
      %c0_35 = arith.constant 0 : index
      %70 = vector.load %arg5[%c1_34, %c0_35] : memref<8x256xf32, #tpu.memory_space<vmem>>, vector<1x256xf32>
      %cst_36 = arith.constant dense<0.000000e+00> : vector<256xf32>
      %71 = vector.multi_reduction <add>, %68, %cst_36 [0] : vector<128x256xf32> to vector<256xf32>
      %72 = vector.shape_cast %71 : vector<256xf32> to vector<1x256xf32>
      %cst_37 = arith.constant 1.280000e+02 : f32
      %73 = vector.broadcast %cst_37 : f32 to vector<1x256xf32>
      %74 = arith.divf %72, %73 : vector<1x256xf32>
      %75 = arith.mulf %68, %68 : vector<128x256xf32>
      %cst_38 = arith.constant dense<0.000000e+00> : vector<256xf32>
      %76 = vector.multi_reduction <add>, %75, %cst_38 [0] : vector<128x256xf32> to vector<256xf32>
      %77 = vector.shape_cast %76 : vector<256xf32> to vector<1x256xf32>
      %cst_39 = arith.constant 1.280000e+02 : f32
      %78 = vector.broadcast %cst_39 : f32 to vector<1x256xf32>
      %79 = arith.divf %77, %78 : vector<1x256xf32>
      %80 = arith.mulf %74, %74 : vector<1x256xf32>
      %81 = arith.subf %79, %80 : vector<1x256xf32>
      %cst_40 = arith.constant 0.000000e+00 : f32
      %82 = vector.broadcast %cst_40 : f32 to vector<1x256xf32>
      %83 = arith.maximumf %81, %82 : vector<1x256xf32>
      %cst_41 = arith.constant 9.99999974E-6 : f32
      %84 = vector.broadcast %cst_41 : f32 to vector<1x256xf32>
      %85 = arith.addf %83, %84 : vector<1x256xf32>
      %86 = math.rsqrt %85 : vector<1x256xf32>
      %87 = arith.mulf %86, %69 : vector<1x256xf32>
      %88 = arith.mulf %74, %87 : vector<1x256xf32>
      %89 = arith.subf %70, %88 : vector<1x256xf32>
      %90 = vector.broadcast %87 : vector<1x256xf32> to vector<128x256xf32>
      %91 = arith.mulf %68, %90 : vector<128x256xf32>
      %92 = vector.broadcast %89 : vector<1x256xf32> to vector<128x256xf32>
      %93 = arith.addf %91, %92 : vector<128x256xf32>
      %cst_42 = arith.constant 0.000000e+00 : f32
      %94 = vector.broadcast %cst_42 : f32 to vector<128x256xf32>
      %95 = arith.maximumf %93, %94 : vector<128x256xf32>
      %96 = arith.truncf %95 : vector<128x256xf32> to vector<128x256xbf16>
      %c0_43 = arith.constant 0 : index
      %c0_44 = arith.constant 0 : index
      %97 = vector.load %arg9[%c0_43, %c0_44] : memref<128x256xbf16, #tpu.memory_space<vmem>>, vector<128x256xbf16>
      tpu.vector_store %arg9[%c0_43, %c0_44], %96 {strides = array<i32>} : memref<128x256xbf16, #tpu.memory_space<vmem>>, vector<128x256xbf16>,
    } else {
    }
    %c0 = arith.constant 0 : index
    %c0_1 = arith.constant 0 : index
    %3 = vector.load %arg9[%c0, %c0_1] : memref<128x256xbf16, #tpu.memory_space<vmem>>, vector<128x256xbf16>
    %c0_2 = arith.constant 0 : index
    %c0_3 = arith.constant 0 : index
    %4 = vector.load %arg6[%c0_2, %c0_3] : memref<256x128xbf16, #tpu.memory_space<vmem>>, vector<256x128xbf16>
    %cst = arith.constant dense<0.000000e+00> : vector<128x128xf32>
    %5 = tpu.matmul %3, %4, %cst {dimension_numbers = #tpu.dot_dimension_numbers<[1], [0], [0], [1], [0, 0, 1, 1], [], []>} : vector<128x256xbf16>, vector<256x128xbf16>, vector<128x128xf32> -> vector<128x128xf32>
    %c128_i32 = arith.constant 128 : i32
    %6 = arith.muli %arg0, %c128_i32 : i32
    %7 = tpu.assume_multiple %6, 128 : i32
    %c0_4 = arith.constant 0 : index
    %8 = arith.index_cast %7 : i32 to index
    %9 = vector.load %arg7[%c0_4, %8] : memref<8x256xf32, #tpu.memory_space<vmem>>, vector<1x128xf32>
    %c1 = arith.constant 1 : index
    %10 = arith.index_cast %7 : i32 to index
    %11 = vector.load %arg7[%c1, %10] : memref<8x256xf32, #tpu.memory_space<vmem>>, vector<1x128xf32>
    %cst_5 = arith.constant dense<0.000000e+00> : vector<128xf32>
    %12 = vector.multi_reduction <add>, %5, %cst_5 [0] : vector<128x128xf32> to vector<128xf32>
    %13 = vector.shape_cast %12 : vector<128xf32> to vector<1x128xf32>
    %cst_6 = arith.constant 1.280000e+02 : f32
    %14 = vector.broadcast %cst_6 : f32 to vector<1x128xf32>
    %15 = arith.divf %13, %14 : vector<1x128xf32>
    %16 = arith.mulf %5, %5 : vector<128x128xf32>
    %cst_7 = arith.constant dense<0.000000e+00> : vector<128xf32>
    %17 = vector.multi_reduction <add>, %16, %cst_7 [0] : vector<128x128xf32> to vector<128xf32>
    %18 = vector.shape_cast %17 : vector<128xf32> to vector<1x128xf32>
    %cst_8 = arith.constant 1.280000e+02 : f32
    %19 = vector.broadcast %cst_8 : f32 to vector<1x128xf32>
    %20 = arith.divf %18, %19 : vector<1x128xf32>
    %21 = arith.mulf %15, %15 : vector<1x128xf32>
    %22 = arith.subf %20, %21 : vector<1x128xf32>
    %cst_9 = arith.constant 0.000000e+00 : f32
    %23 = vector.broadcast %cst_9 : f32 to vector<1x128xf32>
    %24 = arith.maximumf %22, %23 : vector<1x128xf32>
    %cst_10 = arith.constant 9.99999974E-6 : f32
    %25 = vector.broadcast %cst_10 : f32 to vector<1x128xf32>
    %26 = arith.addf %24, %25 : vector<1x128xf32>
    %27 = math.rsqrt %26 : vector<1x128xf32>
    %28 = arith.mulf %27, %9 : vector<1x128xf32>
    %29 = arith.mulf %15, %28 : vector<1x128xf32>
    %30 = arith.subf %11, %29 : vector<1x128xf32>
    %31 = vector.broadcast %28 : vector<1x128xf32> to vector<128x128xf32>
    %32 = arith.mulf %5, %31 : vector<128x128xf32>
    %33 = vector.broadcast %30 : vector<1x128xf32> to vector<128x128xf32>
    %34 = arith.addf %32, %33 : vector<128x128xf32>
    %c0_11 = arith.constant 0 : index
    %c0_12 = arith.constant 0 : index
    %35 = vector.load %arg8[%c0_11, %c0_12] : memref<128x128xf32, #tpu.memory_space<vmem>>, vector<128x128xf32>
    tpu.vector_store %arg8[%c0_11, %c0_12], %34 {strides = array<i32>} : memref<128x128xf32, #tpu.memory_space<vmem>>, vector<128x128xf32>,
    return
  }
  func.func @transform_0(%arg0: i32) -> (i32, i32) {
    %c0_i32 = arith.constant 0 : i32
    %c0_i32_0 = arith.constant 0 : i32
    %c0_i32_1 = arith.constant 0 : i32
    return %c0_i32, %c0_i32_0 : i32, i32
  }
  func.func @transform_1(%arg0: i32) -> (i32, i32) {
    %c0_i32 = arith.constant 0 : i32
    %c0_i32_0 = arith.constant 0 : i32
    %c0_i32_1 = arith.constant 0 : i32
    return %c0_i32, %c0_i32_0 : i32, i32
  }
  func.func @transform_2(%arg0: i32) -> (i32, i32) {
    %c0_i32 = arith.constant 0 : i32
    %c0_i32_0 = arith.constant 0 : i32
    %c0_i32_1 = arith.constant 0 : i32
    return %c0_i32, %c0_i32_0 : i32, i32
  }
  func.func @transform_3(%arg0: i32) -> (i32, i32) {
    %c0_i32 = arith.constant 0 : i32
    %c0_i32_0 = arith.constant 0 : i32
    %c0_i32_1 = arith.constant 0 : i32
    return %c0_i32, %c0_i32_0 : i32, i32
  }
  func.func @transform_4(%arg0: i32) -> (i32, i32) {
    %c0_i32 = arith.constant 0 : i32
    %c0_i32_0 = arith.constant 0 : i32
    %c0_i32_1 = arith.constant 0 : i32
    return %c0_i32, %c0_i32_0 : i32, i32
  }
  func.func @transform_5(%arg0: i32) -> (i32, i32) {
    %c0_i32 = arith.constant 0 : i32
    %c0_i32_0 = arith.constant 0 : i32
    return %c0_i32, %arg0 : i32, i32
  }
  func.func @transform_6(%arg0: i32) -> (i32, i32) {
    %c0_i32 = arith.constant 0 : i32
    %c0_i32_0 = arith.constant 0 : i32
    %c0_i32_1 = arith.constant 0 : i32
    return %c0_i32, %c0_i32_0 : i32, i32
  }
  func.func @transform_7(%arg0: i32) -> (i32, i32) {
    %c0_i32 = arith.constant 0 : i32
    %c0_i32_0 = arith.constant 0 : i32
    return %c0_i32, %arg0 : i32, i32
  }
}

</mosaic_0001>

<llo_original>
// kernel: projection_forward.1
$region0: #{projection_forward.1}
  #allocation0 [shape = 'u32[]', space=smem, size = 0x4, offset = 0x4, fixed_abs, tag = 'smem constant byte address 0x4 - core index']
  #allocation1 [shape = 'u32[72,128]{1,0:T(1,128)}', space=vmem, size = 0x9000, scoped, tag = 'internal scratch']
  #allocation2 [shape = 'bf16[128,256]{1,0:T(8,128)(2,1)}', space=vmem, size = 0x10000, scoped, tag = 'scratch operand']
  %s0 = inlined_call_operand.vmem [shape: bf16[128,128], index: 0, kind: input, shape index: {}]
  %s1 = inlined_call_operand.vmem [shape: bf16[128,256], index: 1, kind: input, shape index: {}]
  %s2 = inlined_call_operand.vmem [shape: f32[8,256], index: 2, kind: input, shape index: {}]
  %s3 = inlined_call_operand.hbm [shape: bf16[256,256], index: 3, kind: input, shape index: {}]
  %s4 = inlined_call_operand.vmem [shape: f32[8,256], index: 4, kind: input, shape index: {}]
  %s5 = inlined_call_operand.hbm [shape: bf16[256,256], index: 5, kind: input, shape index: {}]
  %s6 = inlined_call_operand.vmem [shape: f32[8,256], index: 6, kind: input, shape index: {}]
  %s7 = inlined_call_operand.hbm [shape: f32[128,256], index: 7, kind: output, shape index: {}]
  %s8 = sld [smem:[#allocation0]]
  $region73: #{projection_forward.1} parent=0
    _
  %s10 = ssub.s32 1, %s8
  %s11 = scalar_select 0, %s10, %s8
  $region1: #{projection_forward.1} parent=0
    #allocation3 [shape = 'u8[131072]{0}', space=vmem, size = 0x20000, scoped, tag = 'input window, operand 3, single buffered']
    #allocation4 [shape = 's32[2]{0}', space=sflag, size = 0x8, scoped, tag = 'scoped memory for projection_forward.1']
    #allocation5 [shape = 's32[2]{0}', space=sflag, size = 0x8, scoped, tag = 'scoped memory for projection_forward.1']
    #allocation6 [shape = 'u8[131072]{0}', space=vmem, size = 0x20000, scoped, tag = 'input window, operand 5']
    #allocation7 [shape = 's32[2]{0}', space=sflag, size = 0x8, scoped, tag = 'scoped memory for projection_forward.1']
    #allocation8 [shape = 'u8[131072]{0}', space=vmem, size = 0x20000, scoped, tag = 'output window, operand 0']
    %12 = vsyncpa [#allocation4], 0
    %13 = vsyncpa [#allocation7], 0
    %s14 = scalar_lea.sflag [#allocation7], 1
    %15 = vsyncpa %s14, 0
    %16 = vsyncpa [#allocation5], 0
    %s17 = scalar_lea.sflag [#allocation5], 1
    %18 = vsyncpa %s17, 0
    loop: start=0, step=1, limit=4
    $region2: #{projection_forward.1} parent=1 // loop_pre_header
      _
    $region3: #{projection_forward.1} parent=1 // loop_header
      %s20 = sphi 0, %s24
      %p21 = scmp.ge.s32.totalorder %s20, 4
      %s28 = sphi 0, %s28
      %s30 = sphi 0, %s28
      %s31 = sphi 0, %s30
      %s45 = sphi 0, %s31
      %s49 = sphi 0, %s49
      %s51 = sphi 0, %s49
      %s52 = sphi 0, %s51
      %s66 = sphi 0, %s52
      %s70 = sphi 0, %s70
      %s72 = sphi 0, %s70
      %s73 = sphi 0, %s72
      %s87 = sphi 0, %s73
      %s91 = sphi 0, %s91
      %s93 = sphi 0, %s91
      %s94 = sphi 0, %s93
      %s108 = sphi 0, %s94
      %s112 = sphi 0, %s112
      %s114 = sphi 0, %s112
      %s115 = sphi 0, %s114
      %s129 = sphi 0, %s115
      %s135 = sphi 0, %s137
      %s138 = sphi 0, %s135
      %s139 = sphi 0, %s138
      %s155 = sphi 0, %s139
      %s159 = sphi 0, %s159
      %s161 = sphi 0, %s159
      %s162 = sphi 0, %s161
      %s176 = sphi 0, %s162
      %s182 = sphi 0, %s184
      %s185 = sphi 0, %s182
      %s186 = sphi 0, %s185
      %s202 = sphi 0, %s186
    $region4: #{projection_forward.1} parent=1 // loop_header_branch
      %23 = sbr.rel (%p21) target = $region8
    $region5: #{projection_forward.1} parent=1 // loop_body
      %s25 = ssub.s32 %s20, 1
      %s26 = ssub.s32 %s20, 2
      %s27 = sadd.s32 %s20, 1
      %s29 = sadd.s32 %s28, 1
      %p32 = scmp.eq.s32.totalorder %s20, 1
      %p33 = scmp.ne.s32.totalorder %s28, %s30
      %p34 = scmp.eq.s32.totalorder %s20, 0
      %p35 = por %p33, %p34
      %p36 = scmp.ne.s32.totalorder %s28, %s30
      %p37 = scmp.eq.s32.totalorder %s25, 1
      %p38 = por %p36, %p37
      %p39 = scmp.ne.s32.totalorder %s30, %s31
      %p40 = scmp.eq.s32.totalorder %s25, 0
      %p41 = por %p39, %p40
      %p42 = scmp.ne.s32.totalorder %s30, %s31
      %p43 = scmp.eq.s32.totalorder %s26, 1
      %p44 = por %p42, %p43
      %p46 = scmp.ne.s32.totalorder %s31, %s45
      %p47 = scmp.eq.s32.totalorder %s26, 0
      %p48 = por %p46, %p47
      %s50 = sadd.s32 %s49, 1
      %p53 = scmp.eq.s32.totalorder %s20, 1
      %p54 = scmp.ne.s32.totalorder %s49, %s51
      %p55 = scmp.eq.s32.totalorder %s20, 0
      %p56 = por %p54, %p55
      %p57 = scmp.ne.s32.totalorder %s49, %s51
      %p58 = scmp.eq.s32.totalorder %s25, 1
      %p59 = por %p57, %p58
      %p60 = scmp.ne.s32.totalorder %s51, %s52
      %p61 = scmp.eq.s32.totalorder %s25, 0
      %p62 = por %p60, %p61
      %p63 = scmp.ne.s32.totalorder %s51, %s52
      %p64 = scmp.eq.s32.totalorder %s26, 1
      %p65 = por %p63, %p64
      %p67 = scmp.ne.s32.totalorder %s52, %s66
      %p68 = scmp.eq.s32.totalorder %s26, 0
      %p69 = por %p67, %p68
      %s71 = sadd.s32 %s70, 1
      %p74 = scmp.eq.s32.totalorder %s20, 1
      %p75 = scmp.ne.s32.totalorder %s70, %s72
      %p76 = scmp.eq.s32.totalorder %s20, 0
      %p77 = por %p75, %p76
      %p78 = scmp.ne.s32.totalorder %s70, %s72
      %p79 = scmp.eq.s32.totalorder %s25, 1
      %p80 = por %p78, %p79
      %p81 = scmp.ne.s32.totalorder %s72, %s73
      %p82 = scmp.eq.s32.totalorder %s25, 0
      %p83 = por %p81, %p82
      %p84 = scmp.ne.s32.totalorder %s72, %s73
      %p85 = scmp.eq.s32.totalorder %s26, 1
      %p86 = por %p84, %p85
      %p88 = scmp.ne.s32.totalorder %s73, %s87
      %p89 = scmp.eq.s32.totalorder %s26, 0
      %p90 = por %p88, %p89
      %s92 = sadd.s32 %s91, 1
      %p95 = scmp.eq.s32.totalorder %s20, 1
      %p96 = scmp.ne.s32.totalorder %s91, %s93
      %p97 = scmp.eq.s32.totalorder %s20, 0
      %p98 = por %p96, %p97
      %p99 = scmp.ne.s32.totalorder %s91, %s93
      %p100 = scmp.eq.s32.totalorder %s25, 1
      %p101 = por %p99, %p100
      %p102 = scmp.ne.s32.totalorder %s93, %s94
      %p103 = scmp.eq.s32.totalorder %s25, 0
      %p104 = por %p102, %p103
      %p105 = scmp.ne.s32.totalorder %s93, %s94
      %p106 = scmp.eq.s32.totalorder %s26, 1
      %p107 = por %p105, %p106
      %p109 = scmp.ne.s32.totalorder %s94, %s108
      %p110 = scmp.eq.s32.totalorder %s26, 0
      %p111 = por %p109, %p110
      %s113 = sadd.s32 %s112, 1
      %p116 = scmp.eq.s32.totalorder %s20, 1
      %p117 = scmp.ne.s32.totalorder %s112, %s114
      %p118 = scmp.eq.s32.totalorder %s20, 0
      %p119 = por %p117, %p118
      %p120 = scmp.ne.s32.totalorder %s112, %s114
      %p121 = scmp.eq.s32.totalorder %s25, 1
      %p122 = por %p120, %p121
      %p123 = scmp.ne.s32.totalorder %s114, %s115
      %p124 = scmp.eq.s32.totalorder %s25, 0
      %p125 = por %p123, %p124
      %p126 = scmp.ne.s32.totalorder %s114, %s115
      %p127 = scmp.eq.s32.totalorder %s26, 1
      %p128 = por %p126, %p127
      %p130 = scmp.ne.s32.totalorder %s115, %s129
      %p131 = scmp.eq.s32.totalorder %s26, 0
      %p132 = por %p130, %p131
      %s133 = ssub.s32 %s20, %s27
      %p134 = scmp.eq.s32.totalorder %s133, 0
      %s136 = sadd.s32 %s135, 1
      %s137 = scalar_select %p134, %s135, %s136
      %p140 = pneg %p134
      %p141 = scmp.eq.s32.totalorder %s20, 1
      %p142 = por %p140, %p141
      %p143 = scmp.ne.s32.totalorder %s135, %s138
      %p144 = scmp.eq.s32.totalorder %s20, 0
      %p145 = por %p143, %p144
      %p146 = scmp.ne.s32.totalorder %s135, %s138
      %p147 = scmp.eq.s32.totalorder %s25, 1
      %p148 = por %p146, %p147
      %p149 = scmp.ne.s32.totalorder %s138, %s139
      %p150 = scmp.eq.s32.totalorder %s25, 0
      %p151 = por %p149, %p150
      %p152 = scmp.ne.s32.totalorder %s138, %s139
      %p153 = scmp.eq.s32.totalorder %s26, 1
      %p154 = por %p152, %p153
      %p156 = scmp.ne.s32.totalorder %s139, %s155
      %p157 = scmp.eq.s32.totalorder %s26, 0
      %p158 = por %p156, %p157
      %s160 = sadd.s32 %s159, 1
      %p163 = scmp.eq.s32.totalorder %s20, 1
      %p164 = scmp.ne.s32.totalorder %s159, %s161
      %p165 = scmp.eq.s32.totalorder %s20, 0
      %p166 = por %p164, %p165
      %p167 = scmp.ne.s32.totalorder %s159, %s161
      %p168 = scmp.eq.s32.totalorder %s25, 1
      %p169 = por %p167, %p168
      %p170 = scmp.ne.s32.totalorder %s161, %s162
      %p171 = scmp.eq.s32.totalorder %s25, 0
      %p172 = por %p170, %p171
      %p173 = scmp.ne.s32.totalorder %s161, %s162
      %p174 = scmp.eq.s32.totalorder %s26, 1
      %p175 = por %p173, %p174
      %p177 = scmp.ne.s32.totalorder %s162, %s176
      %p178 = scmp.eq.s32.totalorder %s26, 0
      %p179 = por %p177, %p178
      %s180 = ssub.s32 %s20, %s27
      %p181 = scmp.eq.s32.totalorder %s180, 0
      %s183 = sadd.s32 %s182, 1
      %s184 = scalar_select %p181, %s182, %s183
      %p187 = pneg %p181
      %p188 = scmp.eq.s32.totalorder %s20, 1
      %p189 = por %p187, %p188
      %p190 = scmp.ne.s32.totalorder %s182, %s185
      %p191 = scmp.eq.s32.totalorder %s20, 0
      %p192 = por %p190, %p191
      %p193 = scmp.ne.s32.totalorder %s182, %s185
      %p194 = scmp.eq.s32.totalorder %s25, 1
      %p195 = por %p193, %p194
      %p196 = scmp.ne.s32.totalorder %s185, %s186
      %p197 = scmp.eq.s32.totalorder %s25, 0
      %p198 = por %p196, %p197
      %p199 = scmp.ne.s32.totalorder %s185, %s186
      %p200 = scmp.eq.s32.totalorder %s26, 1
      %p201 = por %p199, %p200
      %p203 = scmp.ne.s32.totalorder %s186, %s202
      %p204 = scmp.eq.s32.totalorder %s26, 0
      %p205 = por %p203, %p204
      %p206 = scmp.le.s32.totalorder 1, %s20
      %p207 = scmp.lt.s32.totalorder %s20, 3
      %p208 = pnand %p206, %p207
      %p209 = pneg %p208
      // Predicated region
      $region9: #{projection_forward.1} parent=5 // pred_check
        _
      $region10: #{projection_forward.1} parent=5 // pred_check_branch
        %211 = sbr.rel (%p208) target = $region12
      $region11: #{projection_forward.1} parent=5 // pred_region
        %s212 = ssub.s32 %s20, 1
        // Predicated region
        $region13: #{projection_forward.1} parent=11 // pred_check
          %p213 = pneg %p41
        $region14: #{projection_forward.1} parent=11 // pred_check_branch
          %215 = sbr.rel (%p213) target = $region16
        $region15: #{projection_forward.1} parent=11 // pred_region
          _
        $region16: #{projection_forward.1} parent=11 // pred_fallthru
          _
        // Predicated region
        $region17: #{projection_forward.1} parent=11 // pred_check
          %p216 = pneg %p62
        $region18: #{projection_forward.1} parent=11 // pred_check_branch
          %218 = sbr.rel (%p216) target = $region20
        $region19: #{projection_forward.1} parent=11 // pred_region
          _
        $region20: #{projection_forward.1} parent=11 // pred_fallthru
          _
        // Predicated region
        $region21: #{projection_forward.1} parent=11 // pred_check
          %p219 = pneg %p83
        $region22: #{projection_forward.1} parent=11 // pred_check_branch
          %221 = sbr.rel (%p219) target = $region24
        $region23: #{projection_forward.1} parent=11 // pred_region
          _
        $region24: #{projection_forward.1} parent=11 // pred_fallthru
          _
        // Predicated region
        $region25: #{projection_forward.1} parent=11 // pred_check
          %p222 = pneg %p104
        $region26: #{projection_forward.1} parent=11 // pred_check_branch
          %224 = sbr.rel (%p222) target = $region28
        $region27: #{projection_forward.1} parent=11 // pred_region
          %226 = vsyncadd [#allocation4], 0
          %s227 = sshll.u32 %s3, 4
          %s228 = int_to_ptr.hbm [resolvable:$true] %s227
          %s229 = sshll.u32 [#allocation3], 4
          %s230 = int_to_ptr.vmem [resolvable:$true] %s229
          %235 = dma.hbm_to_vmem [thread:$0]  %s228, 4096, %s230, [#allocation4], 128, 128, 8
        $region28: #{projection_forward.1} parent=11 // pred_fallthru
          _
        // Predicated region
        $region29: #{projection_forward.1} parent=11 // pred_check
          %p236 = pneg %p125
        $region30: #{projection_forward.1} parent=11 // pred_check_branch
          %238 = sbr.rel (%p236) target = $region32
        $region31: #{projection_forward.1} parent=11 // pred_region
          _
        $region32: #{projection_forward.1} parent=11 // pred_fallthru
          _
        // Predicated region
        $region33: #{projection_forward.1} parent=11 // pred_check
          %p239 = pneg %p172
        $region34: #{projection_forward.1} parent=11 // pred_check_branch
          %241 = sbr.rel (%p239) target = $region36
        $region35: #{projection_forward.1} parent=11 // pred_region
          _
        $region36: #{projection_forward.1} parent=11 // pred_fallthru
          _
      $region12: #{projection_forward.1} parent=5 // pred_fallthru
        _
      %p242 = scmp.lt.s32.totalorder %s20, 2
      // Predicated region
      $region37: #{projection_forward.1} parent=5 // pred_check
        %p243 = pneg %p242
      $region38: #{projection_forward.1} parent=5 // pred_check_branch
        %245 = sbr.rel (%p243) target = $region40
      $region39: #{projection_forward.1} parent=5 // pred_region
        // Predicated region
        $region41: #{projection_forward.1} parent=39 // pred_check
          %p246 = pneg %p145
        $region42: #{projection_forward.1} parent=39 // pred_check_branch
          %248 = sbr.rel (%p246) target = $region44
        $region43: #{projection_forward.1} parent=39 // pred_region
          %s249 = sand.u32 %s135, 1
          %s250 = scalar_lea.sflag [#allocation7], %s249
          %s251 = sand.u32 %s135, 1
          %s252 = smul.addr %s251, 128
          %s253 = scalar_lea.vmem [#allocation6], %s252
          %255 = vsyncadd %s250, 0
          %s256 = smul.addr %s20, 4
          %s257 = scalar_lea.hbm %s5, %s256
          %s258 = sshll.u32 %s257, 4
          %s259 = int_to_ptr.hbm [resolvable:$true] %s258
          %s260 = sshll.u32 %s253, 4
          %s261 = int_to_ptr.vmem [resolvable:$true] %s260
          %266 = dma.hbm_to_vmem [thread:$0]  %s259, 2048, %s261, %s250, 128, 64, 4
        $region44: #{projection_forward.1} parent=39 // pred_fallthru
          _
      $region40: #{projection_forward.1} parent=5 // pred_fallthru
        _
      %p267 = scmp.le.s32.totalorder 1, %s20
      %p268 = scmp.lt.s32.totalorder %s20, 3
      %p269 = pnand %p267, %p268
      %p270 = pneg %p269
      // Predicated region
      $region45: #{projection_forward.1} parent=5 // pred_check
        _
      $region46: #{projection_forward.1} parent=5 // pred_check_branch
        %272 = sbr.rel (%p269) target = $region48
      $region47: #{projection_forward.1} parent=5 // pred_region
        %s273 = ssub.s32 %s20, 1
        // Predicated region
        $region49: #{projection_forward.1} parent=47 // pred_check
          %p274 = pneg %p104
        $region50: #{projection_forward.1} parent=47 // pred_check_branch
          %276 = sbr.rel (%p274) target = $region52
        $region51: #{projection_forward.1} parent=47 // pred_region
          %278 = dma.done [#allocation4], 4096
        $region52: #{projection_forward.1} parent=47 // pred_fallthru
          _
        %s279 = sand.u32 %s138, 1
        %s280 = scalar_lea.sflag [#allocation7], %s279
        %s281 = sand.u32 %s138, 1
        %s282 = smul.addr %s281, 128
        %s283 = scalar_lea.vmem [#allocation6], %s282
        // Predicated region
        $region53: #{projection_forward.1} parent=47 // pred_check
          %p284 = pneg %p151
        $region54: #{projection_forward.1} parent=47 // pred_check_branch
          %286 = sbr.rel (%p284) target = $region56
        $region55: #{projection_forward.1} parent=47 // pred_region
          %288 = dma.done %s280, 2048
        $region56: #{projection_forward.1} parent=47 // pred_fallthru
          _
        %p289 = pneg %p41
        %p290 = pneg %p38
        %p291 = pneg %p62
        %p292 = pneg %p59
        %p293 = pneg %p83
        %p294 = pneg %p80
        %p295 = pneg %p104
        %p296 = pneg %p101
        %p297 = pneg %p125
        %p298 = pneg %p122
        %s299 = sand.u32 %s138, 1
        %s300 = scalar_lea.sflag [#allocation7], %s299
        %s301 = sand.u32 %s138, 1
        %s302 = smul.addr %s301, 128
        %s303 = scalar_lea.vmem [#allocation6], %s302
        %p304 = pneg %p151
        %p305 = pneg %p148
        %p306 = pneg %p172
        %p307 = pneg %p169
        %p308 = pneg %p198
        %p309 = pneg %p195
        %s310 = sand.u32 %s185, 1
        %s311 = scalar_lea.sflag [#allocation5], %s310
        %s312 = sand.u32 %s185, 1
        %s313 = smul.addr %s312, 128
        %s314 = scalar_lea.vmem [#allocation8], %s313
        %p315 = scmp.eq.s32.totalorder %s25, 0
        // Predicated region
        $region57: #{projection_forward.1} parent=47 // pred_check
          %p316 = pneg %p315
        $region58: #{projection_forward.1} parent=47 // pred_check_branch
          %318 = sbr.rel (%p316) target = $region60
        $region59: #{projection_forward.1} parent=47 // pred_region
          %v319 = vld [vmem:[%s0] sm:$0xf]
          %v320 = vld [vmem:[%s0 + $0x4] sm:$0xf]
          %v321 = vld [vmem:[%s0 + $0x8] sm:$0xf]
          %v322 = vld [vmem:[%s0 + $0xc] sm:$0xf]
          %v323 = vld [vmem:[%s0 + $0x10] sm:$0xf]
          %v324 = vld [vmem:[%s0 + $0x14] sm:$0xf]
          %v325 = vld [vmem:[%s0 + $0x18] sm:$0xf]
          %v326 = vld [vmem:[%s0 + $0x1c] sm:$0xf]
          %v327 = vld [vmem:[%s0 + $0x20] sm:$0xf]
          %v328 = vld [vmem:[%s0 + $0x24] sm:$0xf]
          %v329 = vld [vmem:[%s0 + $0x28] sm:$0xf]
          %v330 = vld [vmem:[%s0 + $0x2c] sm:$0xf]
          %v331 = vld [vmem:[%s0 + $0x30] sm:$0xf]
          %v332 = vld [vmem:[%s0 + $0x34] sm:$0xf]
          %v333 = vld [vmem:[%s0 + $0x38] sm:$0xf]
          %v334 = vld [vmem:[%s0 + $0x3c] sm:$0xf]
          %v335 = vld [vmem:[%s1] sm:$0xff]
          %v336 = vld [vmem:[%s1 + $0x8] sm:$0xff]
          %v337 = vld [vmem:[%s1 + $0x10] sm:$0xff]
          %v338 = vld [vmem:[%s1 + $0x18] sm:$0xff]
          %v339 = vld [vmem:[%s1 + $0x20] sm:$0xff]
          %v340 = vld [vmem:[%s1 + $0x28] sm:$0xff]
          %v341 = vld [vmem:[%s1 + $0x30] sm:$0xff]
          %v342 = vld [vmem:[%s1 + $0x38] sm:$0xff]
          %v343 = vld [vmem:[%s1 + $0x40] sm:$0xff]
          %v344 = vld [vmem:[%s1 + $0x48] sm:$0xff]
          %v345 = vld [vmem:[%s1 + $0x50] sm:$0xff]
          %v346 = vld [vmem:[%s1 + $0x58] sm:$0xff]
          %v347 = vld [vmem:[%s1 + $0x60] sm:$0xff]
          %v348 = vld [vmem:[%s1 + $0x68] sm:$0xff]
          %v349 = vld [vmem:[%s1 + $0x70] sm:$0xff]
          %v350 = vld [vmem:[%s1 + $0x78] sm:$0xff]
          %v367 = vunpack.c.l.b16 %v319
          %v368 = vunpack.c.l.b16 %v320
          %v369 = vunpack.c.l.b16 %v321
          %v370 = vunpack.c.l.b16 %v322
          %v371 = vunpack.c.l.b16 %v323
          %v372 = vunpack.c.l.b16 %v324
          %v373 = vunpack.c.l.b16 %v325
          %v374 = vunpack.c.l.b16 %v326
          %v375 = vunpack.c.l.b16 %v327
          %v376 = vunpack.c.l.b16 %v328
          %v377 = vunpack.c.l.b16 %v329
          %v378 = vunpack.c.l.b16 %v330
          %v379 = vunpack.c.l.b16 %v331
          %v380 = vunpack.c.l.b16 %v332
          %v381 = vunpack.c.l.b16 %v333
          %v382 = vunpack.c.l.b16 %v334
          %v383 = vpack.c.b16 %v368, %v367
          %v384 = vpack.c.b16 %v370, %v369
          %v385 = vpack.c.b16 %v372, %v371
          %v386 = vpack.c.b16 %v374, %v373
          %v387 = vpack.c.b16 %v376, %v375
          %v388 = vpack.c.b16 %v378, %v377
          %v389 = vpack.c.b16 %v380, %v379
          %v390 = vpack.c.b16 %v382, %v381
          %v415 = vunpack.c.l.b16 %v335
          %v416 = vunpack.c.h.b16 %v335
          %v417 = vunpack.c.l.b16 %v336
          %v418 = vunpack.c.h.b16 %v336
          %v419 = vunpack.c.l.b16 %v337
          %v420 = vunpack.c.h.b16 %v337
          %v421 = vunpack.c.l.b16 %v338
          %v422 = vunpack.c.h.b16 %v338
          %v423 = vunpack.c.l.b16 %v339
          %v424 = vunpack.c.h.b16 %v339
          %v425 = vunpack.c.l.b16 %v340
          %v426 = vunpack.c.h.b16 %v340
          %v427 = vunpack.c.l.b16 %v341
          %v428 = vunpack.c.h.b16 %v341
          %v429 = vunpack.c.l.b16 %v342
          %v430 = vunpack.c.h.b16 %v342
          %v431 = vunpack.c.l.b16 %v343
          %v432 = vunpack.c.h.b16 %v343
          %v433 = vunpack.c.l.b16 %v344
          %v434 = vunpack.c.h.b16 %v344
          %v435 = vunpack.c.l.b16 %v345
          %v436 = vunpack.c.h.b16 %v345
          %v437 = vunpack.c.l.b16 %v346
          %v438 = vunpack.c.h.b16 %v346
          %v439 = vunpack.c.l.b16 %v347
          %v440 = vunpack.c.h.b16 %v347
          %v441 = vunpack.c.l.b16 %v348
          %v442 = vunpack.c.h.b16 %v348
          %v443 = vunpack.c.l.b16 %v349
          %v444 = vunpack.c.h.b16 %v349
          %v445 = vunpack.c.l.b16 %v350
          %v446 = vunpack.c.h.b16 %v350
          %v447 = vpack.c.b16 %v417, %v415
          %v448 = vpack.c.b16 %v418, %v416
          %v449 = vpack.c.b16 %v421, %v419
          %v450 = vpack.c.b16 %v422, %v420
          %v451 = vpack.c.b16 %v425, %v423
          %v452 = vpack.c.b16 %v426, %v424
          %v453 = vpack.c.b16 %v429, %v427
          %v454 = vpack.c.b16 %v430, %v428
          %v455 = vpack.c.b16 %v433, %v431
          %v456 = vpack.c.b16 %v434, %v432
          %v457 = vpack.c.b16 %v437, %v435
          %v458 = vpack.c.b16 %v438, %v436
          %v459 = vpack.c.b16 %v441, %v439
          %v460 = vpack.c.b16 %v442, %v440
          %v461 = vpack.c.b16 %v445, %v443
          %v462 = vpack.c.b16 %v446, %v444
          %479 = vmatpush.bf16.msra.mxu0 %v461
          %480 = vmatpush.bf16.msra.mxu0 %v459
          %481 = vmatpush.bf16.msra.mxu0 %v457
          %482 = vmatpush.bf16.msra.mxu0 %v455
          %483 = vmatpush.bf16.msra.mxu0 %v453
          %484 = vmatpush.bf16.msra.mxu0 %v451
          %485 = vmatpush.bf16.msra.mxu0 %v449
          %486 = vmatpush.bf16.msra.mxu0 %v447
          %487 = vmatmul.bf16.gmra.mxu0 %v383
          %v488 = vpop.f32.mrf.mxu0
          %v489 = vadd.f32 0.0, %v488
          %v490 = vpop.f32.mrf.mxu0
          %v491 = vadd.f32 0.0, %v490
          %492 = vmatmul.bf16.gmra.mxu0 %v384
          %v493 = vpop.f32.mrf.mxu0
          %v494 = vadd.f32 0.0, %v493
          %v495 = vpop.f32.mrf.mxu0
          %v496 = vadd.f32 0.0, %v495
          %497 = vmatmul.bf16.gmra.mxu0 %v385
          %v498 = vpop.f32.mrf.mxu0
          %v499 = vadd.f32 0.0, %v498
          %v500 = vpop.f32.mrf.mxu0
          %v501 = vadd.f32 0.0, %v500
          %502 = vmatmul.bf16.gmra.mxu0 %v386
          %v503 = vpop.f32.mrf.mxu0
          %v504 = vadd.f32 0.0, %v503
          %v505 = vpop.f32.mrf.mxu0
          %v506 = vadd.f32 0.0, %v505
          %507 = vmatmul.bf16.gmra.mxu0 %v387
          %v508 = vpop.f32.mrf.mxu0
          %v509 = vadd.f32 0.0, %v508
          %v510 = vpop.f32.mrf.mxu0
          %v511 = vadd.f32 0.0, %v510
          %512 = vmatmul.bf16.gmra.mxu0 %v388
          %v513 = vpop.f32.mrf.mxu0
          %v514 = vadd.f32 0.0, %v513
          %v515 = vpop.f32.mrf.mxu0
          %v516 = vadd.f32 0.0, %v515
          %517 = vmatmul.bf16.gmra.mxu0 %v389
          %v518 = vpop.f32.mrf.mxu0
          %v519 = vadd.f32 0.0, %v518
          %v520 = vpop.f32.mrf.mxu0
          %v521 = vadd.f32 0.0, %v520
          %522 = vmatmul.bf16.gmra.mxu0 %v390
          %v523 = vpop.f32.mrf.mxu0
          %v524 = vadd.f32 0.0, %v523
          %v525 = vpop.f32.mrf.mxu0
          %v526 = vadd.f32 0.0, %v525
          %527 = vdwg.mxu0
          %528 = vmatpush.bf16.msra.mxu0 %v462
          %529 = vmatpush.bf16.msra.mxu0 %v460
          %530 = vmatpush.bf16.msra.mxu0 %v458
          %531 = vmatpush.bf16.msra.mxu0 %v456
          %532 = vmatpush.bf16.msra.mxu0 %v454
          %533 = vmatpush.bf16.msra.mxu0 %v452
          %534 = vmatpush.bf16.msra.mxu0 %v450
          %535 = vmatpush.bf16.msra.mxu0 %v448
          %536 = vmatmul.bf16.gmra.mxu0 %v383
          %v537 = vpop.f32.mrf.mxu0
          %v538 = vadd.f32 0.0, %v537
          %v539 = vpop.f32.mrf.mxu0
          %v540 = vadd.f32 0.0, %v539
          %541 = vmatmul.bf16.gmra.mxu0 %v384
          %v542 = vpop.f32.mrf.mxu0
          %v543 = vadd.f32 0.0, %v542
          %v544 = vpop.f32.mrf.mxu0
          %v545 = vadd.f32 0.0, %v544
          %546 = vmatmul.bf16.gmra.mxu0 %v385
          %v547 = vpop.f32.mrf.mxu0
          %v548 = vadd.f32 0.0, %v547
          %v549 = vpop.f32.mrf.mxu0
          %v550 = vadd.f32 0.0, %v549
          %551 = vmatmul.bf16.gmra.mxu0 %v386
          %v552 = vpop.f32.mrf.mxu0
          %v553 = vadd.f32 0.0, %v552
          %v554 = vpop.f32.mrf.mxu0
          %v555 = vadd.f32 0.0, %v554
          %556 = vmatmul.bf16.gmra.mxu0 %v387
          %v557 = vpop.f32.mrf.mxu0
          %v558 = vadd.f32 0.0, %v557
          %v559 = vpop.f32.mrf.mxu0
          %v560 = vadd.f32 0.0, %v559
          %561 = vmatmul.bf16.gmra.mxu0 %v388
          %v562 = vpop.f32.mrf.mxu0
          %v563 = vadd.f32 0.0, %v562
          %v564 = vpop.f32.mrf.mxu0
          %v565 = vadd.f32 0.0, %v564
          %566 = vmatmul.bf16.gmra.mxu0 %v389
          %v567 = vpop.f32.mrf.mxu0
          %v568 = vadd.f32 0.0, %v567
          %v569 = vpop.f32.mrf.mxu0
          %v570 = vadd.f32 0.0, %v569
          %571 = vmatmul.bf16.gmra.mxu0 %v390
          %v572 = vpop.f32.mrf.mxu0
          %v573 = vadd.f32 0.0, %v572
          %v574 = vpop.f32.mrf.mxu0
          %v575 = vadd.f32 0.0, %v574
          %576 = vdwg.mxu0
          %v577 = vld [vmem:[%s2] ss:$8 sm:$0x3]
          %s578 = scalar_lea.vmem %s2, 1
          %v579 = vld [vmem:[%s578] ss:$8 sm:$0x3]
          %v580 = vadd.f32 %v489, %v491
          %v581 = vadd.f32 %v580, %v494
          %v582 = vadd.f32 %v581, %v496
          %v583 = vadd.f32 %v582, %v499
          %v584 = vadd.f32 %v583, %v501
          %v585 = vadd.f32 %v584, %v504
          %v586 = vadd.f32 %v585, %v506
          %v587 = vadd.f32 %v586, %v509
          %v588 = vadd.f32 %v587, %v511
          %v589 = vadd.f32 %v588, %v514
          %v590 = vadd.f32 %v589, %v516
          %v591 = vadd.f32 %v590, %v519
          %v592 = vadd.f32 %v591, %v521
          %v593 = vadd.f32 %v592, %v524
          %v594 = vadd.f32 %v593, %v526
          %v595 = vrot.slane %v594, 4
          %v596 = vadd.f32 %v594, %v595
          %v597 = vrot.slane %v596, 2
          %v598 = vadd.f32 %v596, %v597
          %v599 = vrot.slane %v598, 1
          %v600 = vadd.f32 %v598, %v599
          %v601 = vadd.f32 %v538, %v540
          %v602 = vadd.f32 %v601, %v543
          %v603 = vadd.f32 %v602, %v545
          %v604 = vadd.f32 %v603, %v548
          %v605 = vadd.f32 %v604, %v550
          %v606 = vadd.f32 %v605, %v553
          %v607 = vadd.f32 %v606, %v555
          %v608 = vadd.f32 %v607, %v558
          %v609 = vadd.f32 %v608, %v560
          %v610 = vadd.f32 %v609, %v563
          %v611 = vadd.f32 %v610, %v565
          %v612 = vadd.f32 %v611, %v568
          %v613 = vadd.f32 %v612, %v570
          %v614 = vadd.f32 %v613, %v573
          %v615 = vadd.f32 %v614, %v575
          %v616 = vrot.slane %v615, 4
          %v617 = vadd.f32 %v615, %v616
          %v618 = vrot.slane %v617, 2
          %v619 = vadd.f32 %v617, %v618
          %v620 = vrot.slane %v619, 1
          %v621 = vadd.f32 %v619, %v620
          %v622 = vrcp.pop 128.0
          %v623 = vmul.f32 128.0, %v622
          %v624 = vsub.f32 1.0, %v623
          %v625 = vmul.f32 %v622, %v624
          %v626 = vadd.f32 %v622, %v625
          %vm627 = vweird.f32 %v622
          %v628 = vsel %vm627, %v622, %v626
          %v629 = vmul.f32 %v600, %v628
          %v630 = vmul.f32 %v621, %v628
          %v631 = vmul.f32 %v489, %v489
          %v632 = vmul.f32 %v538, %v538
          %v633 = vmul.f32 %v491, %v491
          %v634 = vmul.f32 %v540, %v540
          %v635 = vmul.f32 %v494, %v494
          %v636 = vmul.f32 %v543, %v543
          %v637 = vmul.f32 %v496, %v496
          %v638 = vmul.f32 %v545, %v545
          %v639 = vmul.f32 %v499, %v499
          %v640 = vmul.f32 %v548, %v548
          %v641 = vmul.f32 %v501, %v501
          %v642 = vmul.f32 %v550, %v550
          %v643 = vmul.f32 %v504, %v504
          %v644 = vmul.f32 %v553, %v553
          %v645 = vmul.f32 %v506, %v506
          %v646 = vmul.f32 %v555, %v555
          %v647 = vmul.f32 %v509, %v509
          %v648 = vmul.f32 %v558, %v558
          %v649 = vmul.f32 %v511, %v511
          %v650 = vmul.f32 %v560, %v560
          %v651 = vmul.f32 %v514, %v514
          %v652 = vmul.f32 %v563, %v563
          %v653 = vmul.f32 %v516, %v516
          %v654 = vmul.f32 %v565, %v565
          %v655 = vmul.f32 %v519, %v519
          %v656 = vmul.f32 %v568, %v568
          %v657 = vmul.f32 %v521, %v521
          %v658 = vmul.f32 %v570, %v570
          %v659 = vmul.f32 %v524, %v524
          %v660 = vmul.f32 %v573, %v573
          %v661 = vmul.f32 %v526, %v526
          %v662 = vmul.f32 %v575, %v575
          %v663 = vadd.f32 %v631, %v633
          %v664 = vadd.f32 %v663, %v635
          %v665 = vadd.f32 %v664, %v637
          %v666 = vadd.f32 %v665, %v639
          %v667 = vadd.f32 %v666, %v641
          %v668 = vadd.f32 %v667, %v643
          %v669 = vadd.f32 %v668, %v645
          %v670 = vadd.f32 %v669, %v647
          %v671 = vadd.f32 %v670, %v649
          %v672 = vadd.f32 %v671, %v651
          %v673 = vadd.f32 %v672, %v653
          %v674 = vadd.f32 %v673, %v655
          %v675 = vadd.f32 %v674, %v657
          %v676 = vadd.f32 %v675, %v659
          %v677 = vadd.f32 %v676, %v661
          %v678 = vrot.slane %v677, 4
          %v679 = vadd.f32 %v677, %v678
          %v680 = vrot.slane %v679, 2
          %v681 = vadd.f32 %v679, %v680
          %v682 = vrot.slane %v681, 1
          %v683 = vadd.f32 %v681, %v682
          %v684 = vadd.f32 %v632, %v634
          %v685 = vadd.f32 %v684, %v636
          %v686 = vadd.f32 %v685, %v638
          %v687 = vadd.f32 %v686, %v640
          %v688 = vadd.f32 %v687, %v642
          %v689 = vadd.f32 %v688, %v644
          %v690 = vadd.f32 %v689, %v646
          %v691 = vadd.f32 %v690, %v648
          %v692 = vadd.f32 %v691, %v650
          %v693 = vadd.f32 %v692, %v652
          %v694 = vadd.f32 %v693, %v654
          %v695 = vadd.f32 %v694, %v656
          %v696 = vadd.f32 %v695, %v658
          %v697 = vadd.f32 %v696, %v660
          %v698 = vadd.f32 %v697, %v662
          %v699 = vrot.slane %v698, 4
          %v700 = vadd.f32 %v698, %v699
          %v701 = vrot.slane %v700, 2
          %v702 = vadd.f32 %v700, %v701
          %v703 = vrot.slane %v702, 1
          %v704 = vadd.f32 %v702, %v703
          %v705 = vmul.f32 %v683, %v628
          %v706 = vmul.f32 %v704, %v628
          %v707 = vmul.f32 %v629, %v629
          %v708 = vmul.f32 %v630, %v630
          %v709 = vsub.f32 %v705, %v707
          %v710 = vsub.f32 %v706, %v708
          %v711 = vmax.f32 %v709, 0.0
          %v712 = vmax.f32 %v710, 0.0
          %v713 = vadd.f32 %v711, 1e-05
          %v714 = vadd.f32 %v712, 1e-05
          %v715 = vrsqrt.pop %v713
          %v716 = vmul.f32 %v715, %v713
          %v717 = vmul.f32 %v716, %v715
          %v718 = vmul.f32 0.5, %v717
          %v719 = vsub.f32 1.5, %v718
          %v720 = vmul.f32 %v715, %v719
          %vm721 = vweird.f32 %v713
          %vm722 = vweird.f32 %v715
          %vm723 = vmor %vm721, %vm722
          %v724 = vsel %vm723, %v715, %v720
          %v725 = vrsqrt.pop %v714
          %v726 = vmul.f32 %v725, %v714
          %v727 = vmul.f32 %v726, %v725
          %v728 = vmul.f32 0.5, %v727
          %v729 = vsub.f32 1.5, %v728
          %v730 = vmul.f32 %v725, %v729
          %vm731 = vweird.f32 %v714
          %vm732 = vweird.f32 %v725
          %vm733 = vmor %vm731, %vm732
          %v734 = vsel %vm733, %v725, %v730
          %v736 = vperm.slane %v577, 0
          %v737 = vperm.slane %v577, 1
          %v740 = vmul.f32 %v724, %v736
          %v741 = vmul.f32 %v734, %v737
          %v742 = vmul.f32 %v629, %v740
          %v743 = vmul.f32 %v630, %v741
          %v746 = vrot.slane %v743, 7
          %vm747 = vcmask 1040384
          %v748 = vsel %vm747, %v742, %v746
          %v750 = vsub.f32 %v579, %v748
          %v751 = vperm.slane %v740, 0
          %v752 = vperm.slane %v741, 0
          %v753 = vmul.f32 %v489, %v751
          %v754 = vmul.f32 %v538, %v752
          %v755 = vmul.f32 %v491, %v751
          %v756 = vmul.f32 %v540, %v752
          %v757 = vmul.f32 %v494, %v751
          %v758 = vmul.f32 %v543, %v752
          %v759 = vmul.f32 %v496, %v751
          %v760 = vmul.f32 %v545, %v752
          %v761 = vmul.f32 %v499, %v751
          %v762 = vmul.f32 %v548, %v752
          %v763 = vmul.f32 %v501, %v751
          %v764 = vmul.f32 %v550, %v752
          %v765 = vmul.f32 %v504, %v751
          %v766 = vmul.f32 %v553, %v752
          %v767 = vmul.f32 %v506, %v751
          %v768 = vmul.f32 %v555, %v752
          %v769 = vmul.f32 %v509, %v751
          %v770 = vmul.f32 %v558, %v752
          %v771 = vmul.f32 %v511, %v751
          %v772 = vmul.f32 %v560, %v752
          %v773 = vmul.f32 %v514, %v751
          %v774 = vmul.f32 %v563, %v752
          %v775 = vmul.f32 %v516, %v751
          %v776 = vmul.f32 %v565, %v752
          %v777 = vmul.f32 %v519, %v751
          %v778 = vmul.f32 %v568, %v752
          %v779 = vmul.f32 %v521, %v751
          %v780 = vmul.f32 %v570, %v752
          %v781 = vmul.f32 %v524, %v751
          %v782 = vmul.f32 %v573, %v752
          %v783 = vmul.f32 %v526, %v751
          %v784 = vmul.f32 %v575, %v752
          %v786 = vperm.slane %v750, 0
          %v787 = vperm.slane %v750, 1
          %v790 = vadd.f32 %v753, %v786
          %v791 = vadd.f32 %v754, %v787
          %v792 = vadd.f32 %v755, %v786
          %v793 = vadd.f32 %v756, %v787
          %v794 = vadd.f32 %v757, %v786
          %v795 = vadd.f32 %v758, %v787
          %v796 = vadd.f32 %v759, %v786
          %v797 = vadd.f32 %v760, %v787
          %v798 = vadd.f32 %v761, %v786
          %v799 = vadd.f32 %v762, %v787
          %v800 = vadd.f32 %v763, %v786
          %v801 = vadd.f32 %v764, %v787
          %v802 = vadd.f32 %v765, %v786
          %v803 = vadd.f32 %v766, %v787
          %v804 = vadd.f32 %v767, %v786
          %v805 = vadd.f32 %v768, %v787
          %v806 = vadd.f32 %v769, %v786
          %v807 = vadd.f32 %v770, %v787
          %v808 = vadd.f32 %v771, %v786
          %v809 = vadd.f32 %v772, %v787
          %v810 = vadd.f32 %v773, %v786
          %v811 = vadd.f32 %v774, %v787
          %v812 = vadd.f32 %v775, %v786
          %v813 = vadd.f32 %v776, %v787
          %v814 = vadd.f32 %v777, %v786
          %v815 = vadd.f32 %v778, %v787
          %v816 = vadd.f32 %v779, %v786
          %v817 = vadd.f32 %v780, %v787
          %v818 = vadd.f32 %v781, %v786
          %v819 = vadd.f32 %v782, %v787
          %v820 = vadd.f32 %v783, %v786
          %v821 = vadd.f32 %v784, %v787
          %v822 = vmax.f32 %v790, 0.0
          %v823 = vmax.f32 %v791, 0.0
          %v824 = vmax.f32 %v792, 0.0
          %v825 = vmax.f32 %v793, 0.0
          %v826 = vmax.f32 %v794, 0.0
          %v827 = vmax.f32 %v795, 0.0
          %v828 = vmax.f32 %v796, 0.0
          %v829 = vmax.f32 %v797, 0.0
          %v830 = vmax.f32 %v798, 0.0
          %v831 = vmax.f32 %v799, 0.0
          %v832 = vmax.f32 %v800, 0.0
          %v833 = vmax.f32 %v801, 0.0
          %v834 = vmax.f32 %v802, 0.0
          %v835 = vmax.f32 %v803, 0.0
          %v836 = vmax.f32 %v804, 0.0
          %v837 = vmax.f32 %v805, 0.0
          %v838 = vmax.f32 %v806, 0.0
          %v839 = vmax.f32 %v807, 0.0
          %v840 = vmax.f32 %v808, 0.0
          %v841 = vmax.f32 %v809, 0.0
          %v842 = vmax.f32 %v810, 0.0
          %v843 = vmax.f32 %v811, 0.0
          %v844 = vmax.f32 %v812, 0.0
          %v845 = vmax.f32 %v813, 0.0
          %v846 = vmax.f32 %v814, 0.0
          %v847 = vmax.f32 %v815, 0.0
          %v848 = vmax.f32 %v816, 0.0
          %v849 = vmax.f32 %v817, 0.0
          %v850 = vmax.f32 %v818, 0.0
          %v851 = vmax.f32 %v819, 0.0
          %v852 = vmax.f32 %v820, 0.0
          %v853 = vmax.f32 %v821, 0.0
          %v854 = vpack.c.bf16 %v824, %v822
          %v855 = vpack.c.bf16 %v825, %v823
          %v856 = vpack.c.bf16 %v828, %v826
          %v857 = vpack.c.bf16 %v829, %v827
          %v858 = vpack.c.bf16 %v832, %v830
          %v859 = vpack.c.bf16 %v833, %v831
          %v860 = vpack.c.bf16 %v836, %v834
          %v861 = vpack.c.bf16 %v837, %v835
          %v862 = vpack.c.bf16 %v840, %v838
          %v863 = vpack.c.bf16 %v841, %v839
          %v864 = vpack.c.bf16 %v844, %v842
          %v865 = vpack.c.bf16 %v845, %v843
          %v866 = vpack.c.bf16 %v848, %v846
          %v867 = vpack.c.bf16 %v849, %v847
          %v868 = vpack.c.bf16 %v852, %v850
          %v869 = vpack.c.bf16 %v853, %v851
          %v870 = vld [vmem:[#allocation3] sm:$0xff]
          %v871 = vld [vmem:[#allocation3 + $0x8] sm:$0xff]
          %v872 = vld [vmem:[#allocation3 + $0x10] sm:$0xff]
          %v873 = vld [vmem:[#allocation3 + $0x18] sm:$0xff]
          %v874 = vld [vmem:[#allocation3 + $0x20] sm:$0xff]
          %v875 = vld [vmem:[#allocation3 + $0x28] sm:$0xff]
          %v876 = vld [vmem:[#allocation3 + $0x30] sm:$0xff]
          %v877 = vld [vmem:[#allocation3 + $0x38] sm:$0xff]
          %v878 = vld [vmem:[#allocation3 + $0x40] sm:$0xff]
          %v879 = vld [vmem:[#allocation3 + $0x48] sm:$0xff]
          %v880 = vld [vmem:[#allocation3 + $0x50] sm:$0xff]
          %v881 = vld [vmem:[#allocation3 + $0x58] sm:$0xff]
          %v882 = vld [vmem:[#allocation3 + $0x60] sm:$0xff]
          %v883 = vld [vmem:[#allocation3 + $0x68] sm:$0xff]
          %v884 = vld [vmem:[#allocation3 + $0x70] sm:$0xff]
          %v885 = vld [vmem:[#allocation3 + $0x78] sm:$0xff]
          %v886 = vld [vmem:[#allocation3 + $0x80] sm:$0xff]
          %v887 = vld [vmem:[#allocation3 + $0x88] sm:$0xff]
          %v888 = vld [vmem:[#allocation3 + $0x90] sm:$0xff]
          %v889 = vld [vmem:[#allocation3 + $0x98] sm:$0xff]
          %v890 = vld [vmem:[#allocation3 + $0xa0] sm:$0xff]
          %v891 = vld [vmem:[#allocation3 + $0xa8] sm:$0xff]
          %v892 = vld [vmem:[#allocation3 + $0xb0] sm:$0xff]
          %v893 = vld [vmem:[#allocation3 + $0xb8] sm:$0xff]
          %v894 = vld [vmem:[#allocation3 + $0xc0] sm:$0xff]
          %v895 = vld [vmem:[#allocation3 + $0xc8] sm:$0xff]
          %v896 = vld [vmem:[#allocation3 + $0xd0] sm:$0xff]
          %v897 = vld [vmem:[#allocation3 + $0xd8] sm:$0xff]
          %v898 = vld [vmem:[#allocation3 + $0xe0] sm:$0xff]
          %v899 = vld [vmem:[#allocation3 + $0xe8] sm:$0xff]
          %v900 = vld [vmem:[#allocation3 + $0xf0] sm:$0xff]
          %v901 = vld [vmem:[#allocation3 + $0xf8] sm:$0xff]
          %v934 = vunpack.c.l.b16 %v870
          %v935 = vunpack.c.h.b16 %v870
          %v936 = vunpack.c.l.b16 %v871
          %v937 = vunpack.c.h.b16 %v871
          %v938 = vunpack.c.l.b16 %v872
          %v939 = vunpack.c.h.b16 %v872
          %v940 = vunpack.c.l.b16 %v873
          %v941 = vunpack.c.h.b16 %v873
          %v942 = vunpack.c.l.b16 %v874
          %v943 = vunpack.c.h.b16 %v874
          %v944 = vunpack.c.l.b16 %v875
          %v945 = vunpack.c.h.b16 %v875
          %v946 = vunpack.c.l.b16 %v876
          %v947 = vunpack.c.h.b16 %v876
          %v948 = vunpack.c.l.b16 %v877
          %v949 = vunpack.c.h.b16 %v877
          %v950 = vunpack.c.l.b16 %v878
          %v951 = vunpack.c.h.b16 %v878
          %v952 = vunpack.c.l.b16 %v879
          %v953 = vunpack.c.h.b16 %v879
          %v954 = vunpack.c.l.b16 %v880
          %v955 = vunpack.c.h.b16 %v880
          %v956 = vunpack.c.l.b16 %v881
          %v957 = vunpack.c.h.b16 %v881
          %v958 = vunpack.c.l.b16 %v882
          %v959 = vunpack.c.h.b16 %v882
          %v960 = vunpack.c.l.b16 %v883
          %v961 = vunpack.c.h.b16 %v883
          %v962 = vunpack.c.l.b16 %v884
          %v963 = vunpack.c.h.b16 %v884
          %v964 = vunpack.c.l.b16 %v885
          %v965 = vunpack.c.h.b16 %v885
          %v966 = vunpack.c.l.b16 %v886
          %v967 = vunpack.c.h.b16 %v886
          %v968 = vunpack.c.l.b16 %v887
          %v969 = vunpack.c.h.b16 %v887
          %v970 = vunpack.c.l.b16 %v888
          %v971 = vunpack.c.h.b16 %v888
          %v972 = vunpack.c.l.b16 %v889
          %v973 = vunpack.c.h.b16 %v889
          %v974 = vunpack.c.l.b16 %v890
          %v975 = vunpack.c.h.b16 %v890
          %v976 = vunpack.c.l.b16 %v891
          %v977 = vunpack.c.h.b16 %v891
          %v978 = vunpack.c.l.b16 %v892
          %v979 = vunpack.c.h.b16 %v892
          %v980 = vunpack.c.l.b16 %v893
          %v981 = vunpack.c.h.b16 %v893
          %v982 = vunpack.c.l.b16 %v894
          %v983 = vunpack.c.h.b16 %v894
          %v984 = vunpack.c.l.b16 %v895
          %v985 = vunpack.c.h.b16 %v895
          %v986 = vunpack.c.l.b16 %v896
          %v987 = vunpack.c.h.b16 %v896
          %v988 = vunpack.c.l.b16 %v897
          %v989 = vunpack.c.h.b16 %v897
          %v990 = vunpack.c.l.b16 %v898
          %v991 = vunpack.c.h.b16 %v898
          %v992 = vunpack.c.l.b16 %v899
          %v993 = vunpack.c.h.b16 %v899
          %v994 = vunpack.c.l.b16 %v900
          %v995 = vunpack.c.h.b16 %v900
          %v996 = vunpack.c.l.b16 %v901
          %v997 = vunpack.c.h.b16 %v901
          %v998 = vpack.c.b16 %v936, %v934
          %v999 = vpack.c.b16 %v937, %v935
          %v1000 = vpack.c.b16 %v940, %v938
          %v1001 = vpack.c.b16 %v941, %v939
          %v1002 = vpack.c.b16 %v944, %v942
          %v1003 = vpack.c.b16 %v945, %v943
          %v1004 = vpack.c.b16 %v948, %v946
          %v1005 = vpack.c.b16 %v949, %v947
          %v1006 = vpack.c.b16 %v952, %v950
          %v1007 = vpack.c.b16 %v953, %v951
          %v1008 = vpack.c.b16 %v956, %v954
          %v1009 = vpack.c.b16 %v957, %v955
          %v1010 = vpack.c.b16 %v960, %v958
          %v1011 = vpack.c.b16 %v961, %v959
          %v1012 = vpack.c.b16 %v964, %v962
          %v1013 = vpack.c.b16 %v965, %v963
          %v1014 = vpack.c.b16 %v968, %v966
          %v1015 = vpack.c.b16 %v969, %v967
          %v1016 = vpack.c.b16 %v972, %v970
          %v1017 = vpack.c.b16 %v973, %v971
          %v1018 = vpack.c.b16 %v976, %v974
          %v1019 = vpack.c.b16 %v977, %v975
          %v1020 = vpack.c.b16 %v980, %v978
          %v1021 = vpack.c.b16 %v981, %v979
          %v1022 = vpack.c.b16 %v984, %v982
          %v1023 = vpack.c.b16 %v985, %v983
          %v1024 = vpack.c.b16 %v988, %v986
          %v1025 = vpack.c.b16 %v989, %v987
          %v1026 = vpack.c.b16 %v992, %v990
          %v1027 = vpack.c.b16 %v993, %v991
          %v1028 = vpack.c.b16 %v996, %v994
          %v1029 = vpack.c.b16 %v997, %v995
          %1062 = vmatpush.bf16.msra.mxu0 %v1012
          %1063 = vmatpush.bf16.msra.mxu0 %v1010
          %1064 = vmatpush.bf16.msra.mxu0 %v1008
          %1065 = vmatpush.bf16.msra.mxu0 %v1006
          %1066 = vmatpush.bf16.msra.mxu0 %v1004
          %1067 = vmatpush.bf16.msra.mxu0 %v1002
          %1068 = vmatpush.bf16.msra.mxu0 %v1000
          %1069 = vmatpush.bf16.msra.mxu0 %v998
          %1070 = vmatmul.bf16.gmra.mxu0 %v854
          %v1071 = vpop.f32.mrf.mxu0
          %v1072 = vadd.f32 0.0, %v1071
          %v1073 = vpop.f32.mrf.mxu0
          %v1074 = vadd.f32 0.0, %v1073
          %1075 = vmatmul.bf16.gmra.mxu0 %v856
          %v1076 = vpop.f32.mrf.mxu0
          %v1077 = vadd.f32 0.0, %v1076
          %v1078 = vpop.f32.mrf.mxu0
          %v1079 = vadd.f32 0.0, %v1078
          %1080 = vmatmul.bf16.gmra.mxu0 %v858
          %v1081 = vpop.f32.mrf.mxu0
          %v1082 = vadd.f32 0.0, %v1081
          %v1083 = vpop.f32.mrf.mxu0
          %v1084 = vadd.f32 0.0, %v1083
          %1085 = vmatmul.bf16.gmra.mxu0 %v860
          %v1086 = vpop.f32.mrf.mxu0
          %v1087 = vadd.f32 0.0, %v1086
          %v1088 = vpop.f32.mrf.mxu0
          %v1089 = vadd.f32 0.0, %v1088
          %1090 = vmatmul.bf16.gmra.mxu0 %v862
          %v1091 = vpop.f32.mrf.mxu0
          %v1092 = vadd.f32 0.0, %v1091
          %v1093 = vpop.f32.mrf.mxu0
          %v1094 = vadd.f32 0.0, %v1093
          %1095 = vmatmul.bf16.gmra.mxu0 %v864
          %v1096 = vpop.f32.mrf.mxu0
          %v1097 = vadd.f32 0.0, %v1096
          %v1098 = vpop.f32.mrf.mxu0
          %v1099 = vadd.f32 0.0, %v1098
          %1100 = vmatmul.bf16.gmra.mxu0 %v866
          %v1101 = vpop.f32.mrf.mxu0
          %v1102 = vadd.f32 0.0, %v1101
          %v1103 = vpop.f32.mrf.mxu0
          %v1104 = vadd.f32 0.0, %v1103
          %1105 = vmatmul.bf16.gmra.mxu0 %v868
          %v1106 = vpop.f32.mrf.mxu0
          %v1107 = vadd.f32 0.0, %v1106
          %v1108 = vpop.f32.mrf.mxu0
          %v1109 = vadd.f32 0.0, %v1108
          %1110 = vdwg.mxu0
          %1111 = vmatpush.bf16.msra.mxu0 %v1028
          %1112 = vmatpush.bf16.msra.mxu0 %v1026
          %1113 = vmatpush.bf16.msra.mxu0 %v1024
          %1114 = vmatpush.bf16.msra.mxu0 %v1022
          %1115 = vmatpush.bf16.msra.mxu0 %v1020
          %1116 = vmatpush.bf16.msra.mxu0 %v1018
          %1117 = vmatpush.bf16.msra.mxu0 %v1016
          %1118 = vmatpush.bf16.msra.mxu0 %v1014
          %1119 = vmatmul.bf16.gmra.mxu0 %v855
          %v1120 = vpop.f32.mrf.mxu0
          %v1121 = vadd.f32 %v1072, %v1120
          %v1122 = vpop.f32.mrf.mxu0
          %v1123 = vadd.f32 %v1074, %v1122
          %1124 = vmatmul.bf16.gmra.mxu0 %v857
          %v1125 = vpop.f32.mrf.mxu0
          %v1126 = vadd.f32 %v1077, %v1125
          %v1127 = vpop.f32.mrf.mxu0
          %v1128 = vadd.f32 %v1079, %v1127
          %1129 = vmatmul.bf16.gmra.mxu0 %v859
          %v1130 = vpop.f32.mrf.mxu0
          %v1131 = vadd.f32 %v1082, %v1130
          %v1132 = vpop.f32.mrf.mxu0
          %v1133 = vadd.f32 %v1084, %v1132
          %1134 = vmatmul.bf16.gmra.mxu0 %v861
          %v1135 = vpop.f32.mrf.mxu0
          %v1136 = vadd.f32 %v1087, %v1135
          %v1137 = vpop.f32.mrf.mxu0
          %v1138 = vadd.f32 %v1089, %v1137
          %1139 = vmatmul.bf16.gmra.mxu0 %v863
          %v1140 = vpop.f32.mrf.mxu0
          %v1141 = vadd.f32 %v1092, %v1140
          %v1142 = vpop.f32.mrf.mxu0
          %v1143 = vadd.f32 %v1094, %v1142
          %1144 = vmatmul.bf16.gmra.mxu0 %v865
          %v1145 = vpop.f32.mrf.mxu0
          %v1146 = vadd.f32 %v1097, %v1145
          %v1147 = vpop.f32.mrf.mxu0
          %v1148 = vadd.f32 %v1099, %v1147
          %1149 = vmatmul.bf16.gmra.mxu0 %v867
          %v1150 = vpop.f32.mrf.mxu0
          %v1151 = vadd.f32 %v1102, %v1150
          %v1152 = vpop.f32.mrf.mxu0
          %v1153 = vadd.f32 %v1104, %v1152
          %1154 = vmatmul.bf16.gmra.mxu0 %v869
          %v1155 = vpop.f32.mrf.mxu0
          %v1156 = vadd.f32 %v1107, %v1155
          %v1157 = vpop.f32.mrf.mxu0
          %v1158 = vadd.f32 %v1109, %v1157
          %1159 = vdwg.mxu0
          %1160 = vmatpush.bf16.msra.mxu0 %v1013
          %1161 = vmatpush.bf16.msra.mxu0 %v1011
          %1162 = vmatpush.bf16.msra.mxu0 %v1009
          %1163 = vmatpush.bf16.msra.mxu0 %v1007
          %1164 = vmatpush.bf16.msra.mxu0 %v1005
          %1165 = vmatpush.bf16.msra.mxu0 %v1003
          %1166 = vmatpush.bf16.msra.mxu0 %v1001
          %1167 = vmatpush.bf16.msra.mxu0 %v999
          %1168 = vmatmul.bf16.gmra.mxu0 %v854
          %v1169 = vpop.f32.mrf.mxu0
          %v1170 = vadd.f32 0.0, %v1169
          %v1171 = vpop.f32.mrf.mxu0
          %v1172 = vadd.f32 0.0, %v1171
          %1173 = vmatmul.bf16.gmra.mxu0 %v856
          %v1174 = vpop.f32.mrf.mxu0
          %v1175 = vadd.f32 0.0, %v1174
          %v1176 = vpop.f32.mrf.mxu0
          %v1177 = vadd.f32 0.0, %v1176
          %1178 = vmatmul.bf16.gmra.mxu0 %v858
          %v1179 = vpop.f32.mrf.mxu0
          %v1180 = vadd.f32 0.0, %v1179
          %v1181 = vpop.f32.mrf.mxu0
          %v1182 = vadd.f32 0.0, %v1181
          %1183 = vmatmul.bf16.gmra.mxu0 %v860
          %v1184 = vpop.f32.mrf.mxu0
          %v1185 = vadd.f32 0.0, %v1184
          %v1186 = vpop.f32.mrf.mxu0
          %v1187 = vadd.f32 0.0, %v1186
          %1188 = vmatmul.bf16.gmra.mxu0 %v862
          %v1189 = vpop.f32.mrf.mxu0
          %v1190 = vadd.f32 0.0, %v1189
          %v1191 = vpop.f32.mrf.mxu0
          %v1192 = vadd.f32 0.0, %v1191
          %1193 = vmatmul.bf16.gmra.mxu0 %v864
          %v1194 = vpop.f32.mrf.mxu0
          %v1195 = vadd.f32 0.0, %v1194
          %v1196 = vpop.f32.mrf.mxu0
          %v1197 = vadd.f32 0.0, %v1196
          %1198 = vmatmul.bf16.gmra.mxu0 %v866
          %v1199 = vpop.f32.mrf.mxu0
          %v1200 = vadd.f32 0.0, %v1199
          %v1201 = vpop.f32.mrf.mxu0
          %v1202 = vadd.f32 0.0, %v1201
          %1203 = vmatmul.bf16.gmra.mxu0 %v868
          %v1204 = vpop.f32.mrf.mxu0
          %v1205 = vadd.f32 0.0, %v1204
          %v1206 = vpop.f32.mrf.mxu0
          %v1207 = vadd.f32 0.0, %v1206
          %1208 = vdwg.mxu0
          %1209 = vmatpush.bf16.msra.mxu0 %v1029
          %1210 = vmatpush.bf16.msra.mxu0 %v1027
          %1211 = vmatpush.bf16.msra.mxu0 %v1025
          %1212 = vmatpush.bf16.msra.mxu0 %v1023
          %1213 = vmatpush.bf16.msra.mxu0 %v1021
          %1214 = vmatpush.bf16.msra.mxu0 %v1019
          %1215 = vmatpush.bf16.msra.mxu0 %v1017
          %1216 = vmatpush.bf16.msra.mxu0 %v1015
          %1217 = vmatmul.bf16.gmra.mxu0 %v855
          %v1218 = vpop.f32.mrf.mxu0
          %v1219 = vadd.f32 %v1170, %v1218
          %v1220 = vpop.f32.mrf.mxu0
          %v1221 = vadd.f32 %v1172, %v1220
          %1222 = vmatmul.bf16.gmra.mxu0 %v857
          %v1223 = vpop.f32.mrf.mxu0
          %v1224 = vadd.f32 %v1175, %v1223
          %v1225 = vpop.f32.mrf.mxu0
          %v1226 = vadd.f32 %v1177, %v1225
          %1227 = vmatmul.bf16.gmra.mxu0 %v859
          %v1228 = vpop.f32.mrf.mxu0
          %v1229 = vadd.f32 %v1180, %v1228
          %v1230 = vpop.f32.mrf.mxu0
          %v1231 = vadd.f32 %v1182, %v1230
          %1232 = vmatmul.bf16.gmra.mxu0 %v861
          %v1233 = vpop.f32.mrf.mxu0
          %v1234 = vadd.f32 %v1185, %v1233
          %v1235 = vpop.f32.mrf.mxu0
          %v1236 = vadd.f32 %v1187, %v1235
          %1237 = vmatmul.bf16.gmra.mxu0 %v863
          %v1238 = vpop.f32.mrf.mxu0
          %v1239 = vadd.f32 %v1190, %v1238
          %v1240 = vpop.f32.mrf.mxu0
          %v1241 = vadd.f32 %v1192, %v1240
          %1242 = vmatmul.bf16.gmra.mxu0 %v865
          %v1243 = vpop.f32.mrf.mxu0
          %v1244 = vadd.f32 %v1195, %v1243
          %v1245 = vpop.f32.mrf.mxu0
          %v1246 = vadd.f32 %v1197, %v1245
          %1247 = vmatmul.bf16.gmra.mxu0 %v867
          %v1248 = vpop.f32.mrf.mxu0
          %v1249 = vadd.f32 %v1200, %v1248
          %v1250 = vpop.f32.mrf.mxu0
          %v1251 = vadd.f32 %v1202, %v1250
          %1252 = vmatmul.bf16.gmra.mxu0 %v869
          %v1253 = vpop.f32.mrf.mxu0
          %v1254 = vadd.f32 %v1205, %v1253
          %v1255 = vpop.f32.mrf.mxu0
          %v1256 = vadd.f32 %v1207, %v1255
          %1257 = vdwg.mxu0
          %v1258 = vld [vmem:[%s4] ss:$8 sm:$0x3]
          %s1259 = scalar_lea.vmem %s4, 1
          %v1260 = vld [vmem:[%s1259] ss:$8 sm:$0x3]
          %v1261 = vadd.f32 %v1121, %v1123
          %v1262 = vadd.f32 %v1261, %v1126
          %v1263 = vadd.f32 %v1262, %v1128
          %v1264 = vadd.f32 %v1263, %v1131
          %v1265 = vadd.f32 %v1264, %v1133
          %v1266 = vadd.f32 %v1265, %v1136
          %v1267 = vadd.f32 %v1266, %v1138
          %v1268 = vadd.f32 %v1267, %v1141
          %v1269 = vadd.f32 %v1268, %v1143
          %v1270 = vadd.f32 %v1269, %v1146
          %v1271 = vadd.f32 %v1270, %v1148
          %v1272 = vadd.f32 %v1271, %v1151
          %v1273 = vadd.f32 %v1272, %v1153
          %v1274 = vadd.f32 %v1273, %v1156
          %v1275 = vadd.f32 %v1274, %v1158
          %v1276 = vrot.slane %v1275, 4
          %v1277 = vadd.f32 %v1275, %v1276
          %v1278 = vrot.slane %v1277, 2
          %v1279 = vadd.f32 %v1277, %v1278
          %v1280 = vrot.slane %v1279, 1
          %v1281 = vadd.f32 %v1279, %v1280
          %v1282 = vadd.f32 %v1219, %v1221
          %v1283 = vadd.f32 %v1282, %v1224
          %v1284 = vadd.f32 %v1283, %v1226
          %v1285 = vadd.f32 %v1284, %v1229
          %v1286 = vadd.f32 %v1285, %v1231
          %v1287 = vadd.f32 %v1286, %v1234
          %v1288 = vadd.f32 %v1287, %v1236
          %v1289 = vadd.f32 %v1288, %v1239
          %v1290 = vadd.f32 %v1289, %v1241
          %v1291 = vadd.f32 %v1290, %v1244
          %v1292 = vadd.f32 %v1291, %v1246
          %v1293 = vadd.f32 %v1292, %v1249
          %v1294 = vadd.f32 %v1293, %v1251
          %v1295 = vadd.f32 %v1294, %v1254
          %v1296 = vadd.f32 %v1295, %v1256
          %v1297 = vrot.slane %v1296, 4
          %v1298 = vadd.f32 %v1296, %v1297
          %v1299 = vrot.slane %v1298, 2
          %v1300 = vadd.f32 %v1298, %v1299
          %v1301 = vrot.slane %v1300, 1
          %v1302 = vadd.f32 %v1300, %v1301
          %v1303 = vmul.f32 %v1281, %v628
          %v1304 = vmul.f32 %v1302, %v628
          %v1305 = vmul.f32 %v1121, %v1121
          %v1306 = vmul.f32 %v1219, %v1219
          %v1307 = vmul.f32 %v1123, %v1123
          %v1308 = vmul.f32 %v1221, %v1221
          %v1309 = vmul.f32 %v1126, %v1126
          %v1310 = vmul.f32 %v1224, %v1224
          %v1311 = vmul.f32 %v1128, %v1128
          %v1312 = vmul.f32 %v1226, %v1226
          %v1313 = vmul.f32 %v1131, %v1131
          %v1314 = vmul.f32 %v1229, %v1229
          %v1315 = vmul.f32 %v1133, %v1133
          %v1316 = vmul.f32 %v1231, %v1231
          %v1317 = vmul.f32 %v1136, %v1136
          %v1318 = vmul.f32 %v1234, %v1234
          %v1319 = vmul.f32 %v1138, %v1138
          %v1320 = vmul.f32 %v1236, %v1236
          %v1321 = vmul.f32 %v1141, %v1141
          %v1322 = vmul.f32 %v1239, %v1239
          %v1323 = vmul.f32 %v1143, %v1143
          %v1324 = vmul.f32 %v1241, %v1241
          %v1325 = vmul.f32 %v1146, %v1146
          %v1326 = vmul.f32 %v1244, %v1244
          %v1327 = vmul.f32 %v1148, %v1148
          %v1328 = vmul.f32 %v1246, %v1246
          %v1329 = vmul.f32 %v1151, %v1151
          %v1330 = vmul.f32 %v1249, %v1249
          %v1331 = vmul.f32 %v1153, %v1153
          %v1332 = vmul.f32 %v1251, %v1251
          %v1333 = vmul.f32 %v1156, %v1156
          %v1334 = vmul.f32 %v1254, %v1254
          %v1335 = vmul.f32 %v1158, %v1158
          %v1336 = vmul.f32 %v1256, %v1256
          %v1337 = vadd.f32 %v1305, %v1307
          %v1338 = vadd.f32 %v1337, %v1309
          %v1339 = vadd.f32 %v1338, %v1311
          %v1340 = vadd.f32 %v1339, %v1313
          %v1341 = vadd.f32 %v1340, %v1315
          %v1342 = vadd.f32 %v1341, %v1317
          %v1343 = vadd.f32 %v1342, %v1319
          %v1344 = vadd.f32 %v1343, %v1321
          %v1345 = vadd.f32 %v1344, %v1323
          %v1346 = vadd.f32 %v1345, %v1325
          %v1347 = vadd.f32 %v1346, %v1327
          %v1348 = vadd.f32 %v1347, %v1329
          %v1349 = vadd.f32 %v1348, %v1331
          %v1350 = vadd.f32 %v1349, %v1333
          %v1351 = vadd.f32 %v1350, %v1335
          %v1352 = vrot.slane %v1351, 4
          %v1353 = vadd.f32 %v1351, %v1352
          %v1354 = vrot.slane %v1353, 2
          %v1355 = vadd.f32 %v1353, %v1354
          %v1356 = vrot.slane %v1355, 1
          %v1357 = vadd.f32 %v1355, %v1356
          %v1358 = vadd.f32 %v1306, %v1308
          %v1359 = vadd.f32 %v1358, %v1310
          %v1360 = vadd.f32 %v1359, %v1312
          %v1361 = vadd.f32 %v1360, %v1314
          %v1362 = vadd.f32 %v1361, %v1316
          %v1363 = vadd.f32 %v1362, %v1318
          %v1364 = vadd.f32 %v1363, %v1320
          %v1365 = vadd.f32 %v1364, %v1322
          %v1366 = vadd.f32 %v1365, %v1324
          %v1367 = vadd.f32 %v1366, %v1326
          %v1368 = vadd.f32 %v1367, %v1328
          %v1369 = vadd.f32 %v1368, %v1330
          %v1370 = vadd.f32 %v1369, %v1332
          %v1371 = vadd.f32 %v1370, %v1334
          %v1372 = vadd.f32 %v1371, %v1336
          %v1373 = vrot.slane %v1372, 4
          %v1374 = vadd.f32 %v1372, %v1373
          %v1375 = vrot.slane %v1374, 2
          %v1376 = vadd.f32 %v1374, %v1375
          %v1377 = vrot.slane %v1376, 1
          %v1378 = vadd.f32 %v1376, %v1377
          %v1379 = vmul.f32 %v1357, %v628
          %v1380 = vmul.f32 %v1378, %v628
          %v1381 = vmul.f32 %v1303, %v1303
          %v1382 = vmul.f32 %v1304, %v1304
          %v1383 = vsub.f32 %v1379, %v1381
          %v1384 = vsub.f32 %v1380, %v1382
          %v1385 = vmax.f32 %v1383, 0.0
          %v1386 = vmax.f32 %v1384, 0.0
          %v1387 = vadd.f32 %v1385, 1e-05
          %v1388 = vadd.f32 %v1386, 1e-05
          %v1389 = vrsqrt.pop %v1387
          %v1390 = vmul.f32 %v1389, %v1387
          %v1391 = vmul.f32 %v1390, %v1389
          %v1392 = vmul.f32 0.5, %v1391
          %v1393 = vsub.f32 1.5, %v1392
          %v1394 = vmul.f32 %v1389, %v1393
          %vm1395 = vweird.f32 %v1387
          %vm1396 = vweird.f32 %v1389
          %vm1397 = vmor %vm1395, %vm1396
          %v1398 = vsel %vm1397, %v1389, %v1394
          %v1399 = vrsqrt.pop %v1388
          %v1400 = vmul.f32 %v1399, %v1388
          %v1401 = vmul.f32 %v1400, %v1399
          %v1402 = vmul.f32 0.5, %v1401
          %v1403 = vsub.f32 1.5, %v1402
          %v1404 = vmul.f32 %v1399, %v1403
          %vm1405 = vweird.f32 %v1388
          %vm1406 = vweird.f32 %v1399
          %vm1407 = vmor %vm1405, %vm1406
          %v1408 = vsel %vm1407, %v1399, %v1404
          %v1410 = vperm.slane %v1258, 0
          %v1411 = vperm.slane %v1258, 1
          %v1414 = vmul.f32 %v1398, %v1410
          %v1415 = vmul.f32 %v1408, %v1411
          %v1416 = vmul.f32 %v1303, %v1414
          %v1417 = vmul.f32 %v1304, %v1415
          %v1420 = vrot.slane %v1417, 7
          %v1421 = vsel %vm747, %v1416, %v1420
          %v1423 = vsub.f32 %v1260, %v1421
          %v1424 = vperm.slane %v1414, 0
          %v1425 = vperm.slane %v1415, 0
          %v1426 = vmul.f32 %v1121, %v1424
          %v1427 = vmul.f32 %v1219, %v1425
          %v1428 = vmul.f32 %v1123, %v1424
          %v1429 = vmul.f32 %v1221, %v1425
          %v1430 = vmul.f32 %v1126, %v1424
          %v1431 = vmul.f32 %v1224, %v1425
          %v1432 = vmul.f32 %v1128, %v1424
          %v1433 = vmul.f32 %v1226, %v1425
          %v1434 = vmul.f32 %v1131, %v1424
          %v1435 = vmul.f32 %v1229, %v1425
          %v1436 = vmul.f32 %v1133, %v1424
          %v1437 = vmul.f32 %v1231, %v1425
          %v1438 = vmul.f32 %v1136, %v1424
          %v1439 = vmul.f32 %v1234, %v1425
          %v1440 = vmul.f32 %v1138, %v1424
          %v1441 = vmul.f32 %v1236, %v1425
          %v1442 = vmul.f32 %v1141, %v1424
          %v1443 = vmul.f32 %v1239, %v1425
          %v1444 = vmul.f32 %v1143, %v1424
          %v1445 = vmul.f32 %v1241, %v1425
          %v1446 = vmul.f32 %v1146, %v1424
          %v1447 = vmul.f32 %v1244, %v1425
          %v1448 = vmul.f32 %v1148, %v1424
          %v1449 = vmul.f32 %v1246, %v1425
          %v1450 = vmul.f32 %v1151, %v1424
          %v1451 = vmul.f32 %v1249, %v1425
          %v1452 = vmul.f32 %v1153, %v1424
          %v1453 = vmul.f32 %v1251, %v1425
          %v1454 = vmul.f32 %v1156, %v1424
          %v1455 = vmul.f32 %v1254, %v1425
          %v1456 = vmul.f32 %v1158, %v1424
          %v1457 = vmul.f32 %v1256, %v1425
          %v1459 = vperm.slane %v1423, 0
          %v1460 = vperm.slane %v1423, 1
          %v1463 = vadd.f32 %v1426, %v1459
          %v1464 = vadd.f32 %v1427, %v1460
          %v1465 = vadd.f32 %v1428, %v1459
          %v1466 = vadd.f32 %v1429, %v1460
          %v1467 = vadd.f32 %v1430, %v1459
          %v1468 = vadd.f32 %v1431, %v1460
          %v1469 = vadd.f32 %v1432, %v1459
          %v1470 = vadd.f32 %v1433, %v1460
          %v1471 = vadd.f32 %v1434, %v1459
          %v1472 = vadd.f32 %v1435, %v1460
          %v1473 = vadd.f32 %v1436, %v1459
          %v1474 = vadd.f32 %v1437, %v1460
          %v1475 = vadd.f32 %v1438, %v1459
          %v1476 = vadd.f32 %v1439, %v1460
          %v1477 = vadd.f32 %v1440, %v1459
          %v1478 = vadd.f32 %v1441, %v1460
          %v1479 = vadd.f32 %v1442, %v1459
          %v1480 = vadd.f32 %v1443, %v1460
          %v1481 = vadd.f32 %v1444, %v1459
          %v1482 = vadd.f32 %v1445, %v1460
          %v1483 = vadd.f32 %v1446, %v1459
          %v1484 = vadd.f32 %v1447, %v1460
          %v1485 = vadd.f32 %v1448, %v1459
          %v1486 = vadd.f32 %v1449, %v1460
          %v1487 = vadd.f32 %v1450, %v1459
          %v1488 = vadd.f32 %v1451, %v1460
          %v1489 = vadd.f32 %v1452, %v1459
          %v1490 = vadd.f32 %v1453, %v1460
          %v1491 = vadd.f32 %v1454, %v1459
          %v1492 = vadd.f32 %v1455, %v1460
          %v1493 = vadd.f32 %v1456, %v1459
          %v1494 = vadd.f32 %v1457, %v1460
          %v1495 = vmax.f32 %v1463, 0.0
          %v1496 = vmax.f32 %v1464, 0.0
          %v1497 = vmax.f32 %v1465, 0.0
          %v1498 = vmax.f32 %v1466, 0.0
          %v1499 = vmax.f32 %v1467, 0.0
          %v1500 = vmax.f32 %v1468, 0.0
          %v1501 = vmax.f32 %v1469, 0.0
          %v1502 = vmax.f32 %v1470, 0.0
          %v1503 = vmax.f32 %v1471, 0.0
          %v1504 = vmax.f32 %v1472, 0.0
          %v1505 = vmax.f32 %v1473, 0.0
          %v1506 = vmax.f32 %v1474, 0.0
          %v1507 = vmax.f32 %v1475, 0.0
          %v1508 = vmax.f32 %v1476, 0.0
          %v1509 = vmax.f32 %v1477, 0.0
          %v1510 = vmax.f32 %v1478, 0.0
          %v1511 = vmax.f32 %v1479, 0.0
          %v1512 = vmax.f32 %v1480, 0.0
          %v1513 = vmax.f32 %v1481, 0.0
          %v1514 = vmax.f32 %v1482, 0.0
          %v1515 = vmax.f32 %v1483, 0.0
          %v1516 = vmax.f32 %v1484, 0.0
          %v1517 = vmax.f32 %v1485, 0.0
          %v1518 = vmax.f32 %v1486, 0.0
          %v1519 = vmax.f32 %v1487, 0.0
          %v1520 = vmax.f32 %v1488, 0.0
          %v1521 = vmax.f32 %v1489, 0.0
          %v1522 = vmax.f32 %v1490, 0.0
          %v1523 = vmax.f32 %v1491, 0.0
          %v1524 = vmax.f32 %v1492, 0.0
          %v1525 = vmax.f32 %v1493, 0.0
          %v1526 = vmax.f32 %v1494, 0.0
          %v1527 = vpack.c.bf16 %v1496, %v1495
          %v1528 = vpack.c.bf16 %v1498, %v1497
          %v1529 = vpack.c.bf16 %v1500, %v1499
          %v1530 = vpack.c.bf16 %v1502, %v1501
          %v1531 = vpack.c.bf16 %v1504, %v1503
          %v1532 = vpack.c.bf16 %v1506, %v1505
          %v1533 = vpack.c.bf16 %v1508, %v1507
          %v1534 = vpack.c.bf16 %v1510, %v1509
          %v1535 = vpack.c.bf16 %v1512, %v1511
          %v1536 = vpack.c.bf16 %v1514, %v1513
          %v1537 = vpack.c.bf16 %v1516, %v1515
          %v1538 = vpack.c.bf16 %v1518, %v1517
          %v1539 = vpack.c.bf16 %v1520, %v1519
          %v1540 = vpack.c.bf16 %v1522, %v1521
          %v1541 = vpack.c.bf16 %v1524, %v1523
          %v1542 = vpack.c.bf16 %v1526, %v1525
          %1543 = vst [vmem:[#allocation2] sm:$0xff] %v1527
          %1544 = vst [vmem:[#allocation2 + $0x8] sm:$0xff] %v1528
          %1545 = vst [vmem:[#allocation2 + $0x10] sm:$0xff] %v1529
          %1546 = vst [vmem:[#allocation2 + $0x18] sm:$0xff] %v1530
          %1547 = vst [vmem:[#allocation2 + $0x20] sm:$0xff] %v1531
          %1548 = vst [vmem:[#allocation2 + $0x28] sm:$0xff] %v1532
          %1549 = vst [vmem:[#allocation2 + $0x30] sm:$0xff] %v1533
          %1550 = vst [vmem:[#allocation2 + $0x38] sm:$0xff] %v1534
          %1551 = vst [vmem:[#allocation2 + $0x40] sm:$0xff] %v1535
          %1552 = vst [vmem:[#allocation2 + $0x48] sm:$0xff] %v1536
          %1553 = vst [vmem:[#allocation2 + $0x50] sm:$0xff] %v1537
          %1554 = vst [vmem:[#allocation2 + $0x58] sm:$0xff] %v1538
          %1555 = vst [vmem:[#allocation2 + $0x60] sm:$0xff] %v1539
          %1556 = vst [vmem:[#allocation2 + $0x68] sm:$0xff] %v1540
          %1557 = vst [vmem:[#allocation2 + $0x70] sm:$0xff] %v1541
          %1558 = vst [vmem:[#allocation2 + $0x78] sm:$0xff] %v1542
        $region60: #{projection_forward.1} parent=47 // pred_fallthru
          _
        %v1559 = vld [vmem:[#allocation2] sm:$0xff]
        %v1560 = vld [vmem:[#allocation2 + $0x8] sm:$0xff]
        %v1561 = vld [vmem:[#allocation2 + $0x10] sm:$0xff]
        %v1562 = vld [vmem:[#allocation2 + $0x18] sm:$0xff]
        %v1563 = vld [vmem:[#allocation2 + $0x20] sm:$0xff]
        %v1564 = vld [vmem:[#allocation2 + $0x28] sm:$0xff]
        %v1565 = vld [vmem:[#allocation2 + $0x30] sm:$0xff]
        %v1566 = vld [vmem:[#allocation2 + $0x38] sm:$0xff]
        %v1567 = vld [vmem:[#allocation2 + $0x40] sm:$0xff]
        %v1568 = vld [vmem:[#allocation2 + $0x48] sm:$0xff]
        %v1569 = vld [vmem:[#allocation2 + $0x50] sm:$0xff]
        %v1570 = vld [vmem:[#allocation2 + $0x58] sm:$0xff]
        %v1571 = vld [vmem:[#allocation2 + $0x60] sm:$0xff]
        %v1572 = vld [vmem:[#allocation2 + $0x68] sm:$0xff]
        %v1573 = vld [vmem:[#allocation2 + $0x70] sm:$0xff]
        %v1574 = vld [vmem:[#allocation2 + $0x78] sm:$0xff]
        %v1575 = vld [vmem:[%s283] sm:$0xf]
        %v1576 = vld [vmem:[%s283 + $0x4] sm:$0xf]
        %v1577 = vld [vmem:[%s283 + $0x8] sm:$0xf]
        %v1578 = vld [vmem:[%s283 + $0xc] sm:$0xf]
        %v1579 = vld [vmem:[%s283 + $0x10] sm:$0xf]
        %v1580 = vld [vmem:[%s283 + $0x14] sm:$0xf]
        %v1581 = vld [vmem:[%s283 + $0x18] sm:$0xf]
        %v1582 = vld [vmem:[%s283 + $0x1c] sm:$0xf]
        %v1583 = vld [vmem:[%s283 + $0x20] sm:$0xf]
        %v1584 = vld [vmem:[%s283 + $0x24] sm:$0xf]
        %v1585 = vld [vmem:[%s283 + $0x28] sm:$0xf]
        %v1586 = vld [vmem:[%s283 + $0x2c] sm:$0xf]
        %v1587 = vld [vmem:[%s283 + $0x30] sm:$0xf]
        %v1588 = vld [vmem:[%s283 + $0x34] sm:$0xf]
        %v1589 = vld [vmem:[%s283 + $0x38] sm:$0xf]
        %v1590 = vld [vmem:[%s283 + $0x3c] sm:$0xf]
        %v1591 = vld [vmem:[%s283 + $0x40] sm:$0xf]
        %v1592 = vld [vmem:[%s283 + $0x44] sm:$0xf]
        %v1593 = vld [vmem:[%s283 + $0x48] sm:$0xf]
        %v1594 = vld [vmem:[%s283 + $0x4c] sm:$0xf]
        %v1595 = vld [vmem:[%s283 + $0x50] sm:$0xf]
        %v1596 = vld [vmem:[%s283 + $0x54] sm:$0xf]
        %v1597 = vld [vmem:[%s283 + $0x58] sm:$0xf]
        %v1598 = vld [vmem:[%s283 + $0x5c] sm:$0xf]
        %v1599 = vld [vmem:[%s283 + $0x60] sm:$0xf]
        %v1600 = vld [vmem:[%s283 + $0x64] sm:$0xf]
        %v1601 = vld [vmem:[%s283 + $0x68] sm:$0xf]
        %v1602 = vld [vmem:[%s283 + $0x6c] sm:$0xf]
        %v1603 = vld [vmem:[%s283 + $0x70] sm:$0xf]
        %v1604 = vld [vmem:[%s283 + $0x74] sm:$0xf]
        %v1605 = vld [vmem:[%s283 + $0x78] sm:$0xf]
        %v1606 = vld [vmem:[%s283 + $0x7c] sm:$0xf]
        %v1623 = vunpack.c.l.b16 %v1559
        %v1624 = vunpack.c.h.b16 %v1559
        %v1625 = vunpack.c.l.b16 %v1560
        %v1626 = vunpack.c.h.b16 %v1560
        %v1627 = vunpack.c.l.b16 %v1561
        %v1628 = vunpack.c.h.b16 %v1561
        %v1629 = vunpack.c.l.b16 %v1562
        %v1630 = vunpack.c.h.b16 %v1562
        %v1631 = vunpack.c.l.b16 %v1563
        %v1632 = vunpack.c.h.b16 %v1563
        %v1633 = vunpack.c.l.b16 %v1564
        %v1634 = vunpack.c.h.b16 %v1564
        %v1635 = vunpack.c.l.b16 %v1565
        %v1636 = vunpack.c.h.b16 %v1565
        %v1637 = vunpack.c.l.b16 %v1566
        %v1638 = vunpack.c.h.b16 %v1566
        %v1639 = vunpack.c.l.b16 %v1567
        %v1640 = vunpack.c.h.b16 %v1567
        %v1641 = vunpack.c.l.b16 %v1568
        %v1642 = vunpack.c.h.b16 %v1568
        %v1643 = vunpack.c.l.b16 %v1569
        %v1644 = vunpack.c.h.b16 %v1569
        %v1645 = vunpack.c.l.b16 %v1570
        %v1646 = vunpack.c.h.b16 %v1570
        %v1647 = vunpack.c.l.b16 %v1571
        %v1648 = vunpack.c.h.b16 %v1571
        %v1649 = vunpack.c.l.b16 %v1572
        %v1650 = vunpack.c.h.b16 %v1572
        %v1651 = vunpack.c.l.b16 %v1573
        %v1652 = vunpack.c.h.b16 %v1573
        %v1653 = vunpack.c.l.b16 %v1574
        %v1654 = vunpack.c.h.b16 %v1574
        %v1655 = vpack.c.b16 %v1625, %v1623
        %v1656 = vpack.c.b16 %v1626, %v1624
        %v1657 = vpack.c.b16 %v1629, %v1627
        %v1658 = vpack.c.b16 %v1630, %v1628
        %v1659 = vpack.c.b16 %v1633, %v1631
        %v1660 = vpack.c.b16 %v1634, %v1632
        %v1661 = vpack.c.b16 %v1637, %v1635
        %v1662 = vpack.c.b16 %v1638, %v1636
        %v1663 = vpack.c.b16 %v1641, %v1639
        %v1664 = vpack.c.b16 %v1642, %v1640
        %v1665 = vpack.c.b16 %v1645, %v1643
        %v1666 = vpack.c.b16 %v1646, %v1644
        %v1667 = vpack.c.b16 %v1649, %v1647
        %v1668 = vpack.c.b16 %v1650, %v1648
        %v1669 = vpack.c.b16 %v1653, %v1651
        %v1670 = vpack.c.b16 %v1654, %v1652
        %v1719 = vunpack.c.l.b16 %v1575
        %v1720 = vunpack.c.l.b16 %v1576
        %v1721 = vunpack.c.l.b16 %v1577
        %v1722 = vunpack.c.l.b16 %v1578
        %v1723 = vunpack.c.l.b16 %v1579
        %v1724 = vunpack.c.l.b16 %v1580
        %v1725 = vunpack.c.l.b16 %v1581
        %v1726 = vunpack.c.l.b16 %v1582
        %v1727 = vunpack.c.l.b16 %v1583
        %v1728 = vunpack.c.l.b16 %v1584
        %v1729 = vunpack.c.l.b16 %v1585
        %v1730 = vunpack.c.l.b16 %v1586
        %v1731 = vunpack.c.l.b16 %v1587
        %v1732 = vunpack.c.l.b16 %v1588
        %v1733 = vunpack.c.l.b16 %v1589
        %v1734 = vunpack.c.l.b16 %v1590
        %v1735 = vunpack.c.l.b16 %v1591
        %v1736 = vunpack.c.l.b16 %v1592
        %v1737 = vunpack.c.l.b16 %v1593
        %v1738 = vunpack.c.l.b16 %v1594
        %v1739 = vunpack.c.l.b16 %v1595
        %v1740 = vunpack.c.l.b16 %v1596
        %v1741 = vunpack.c.l.b16 %v1597
        %v1742 = vunpack.c.l.b16 %v1598
        %v1743 = vunpack.c.l.b16 %v1599
        %v1744 = vunpack.c.l.b16 %v1600
        %v1745 = vunpack.c.l.b16 %v1601
        %v1746 = vunpack.c.l.b16 %v1602
        %v1747 = vunpack.c.l.b16 %v1603
        %v1748 = vunpack.c.l.b16 %v1604
        %v1749 = vunpack.c.l.b16 %v1605
        %v1750 = vunpack.c.l.b16 %v1606
        %v1751 = vpack.c.b16 %v1720, %v1719
        %v1752 = vpack.c.b16 %v1722, %v1721
        %v1753 = vpack.c.b16 %v1724, %v1723
        %v1754 = vpack.c.b16 %v1726, %v1725
        %v1755 = vpack.c.b16 %v1728, %v1727
        %v1756 = vpack.c.b16 %v1730, %v1729
        %v1757 = vpack.c.b16 %v1732, %v1731
        %v1758 = vpack.c.b16 %v1734, %v1733
        %v1759 = vpack.c.b16 %v1736, %v1735
        %v1760 = vpack.c.b16 %v1738, %v1737
        %v1761 = vpack.c.b16 %v1740, %v1739
        %v1762 = vpack.c.b16 %v1742, %v1741
        %v1763 = vpack.c.b16 %v1744, %v1743
        %v1764 = vpack.c.b16 %v1746, %v1745
        %v1765 = vpack.c.b16 %v1748, %v1747
        %v1766 = vpack.c.b16 %v1750, %v1749
        %1783 = vmatpush.bf16.msra.mxu0 %v1758
        %1784 = vmatpush.bf16.msra.mxu0 %v1757
        %1785 = vmatpush.bf16.msra.mxu0 %v1756
        %1786 = vmatpush.bf16.msra.mxu0 %v1755
        %1787 = vmatpush.bf16.msra.mxu0 %v1754
        %1788 = vmatpush.bf16.msra.mxu0 %v1753
        %1789 = vmatpush.bf16.msra.mxu0 %v1752
        %1790 = vmatpush.bf16.msra.mxu0 %v1751
        %1791 = vmatmul.bf16.gmra.mxu0 %v1655
        %v1792 = vpop.f32.mrf.mxu0
        %v1793 = vadd.f32 0.0, %v1792
        %v1794 = vpop.f32.mrf.mxu0
        %v1795 = vadd.f32 0.0, %v1794
        %1796 = vmatmul.bf16.gmra.mxu0 %v1657
        %v1797 = vpop.f32.mrf.mxu0
        %v1798 = vadd.f32 0.0, %v1797
        %v1799 = vpop.f32.mrf.mxu0
        %v1800 = vadd.f32 0.0, %v1799
        %1801 = vmatmul.bf16.gmra.mxu0 %v1659
        %v1802 = vpop.f32.mrf.mxu0
        %v1803 = vadd.f32 0.0, %v1802
        %v1804 = vpop.f32.mrf.mxu0
        %v1805 = vadd.f32 0.0, %v1804
        %1806 = vmatmul.bf16.gmra.mxu0 %v1661
        %v1807 = vpop.f32.mrf.mxu0
        %v1808 = vadd.f32 0.0, %v1807
        %v1809 = vpop.f32.mrf.mxu0
        %v1810 = vadd.f32 0.0, %v1809
        %1811 = vmatmul.bf16.gmra.mxu0 %v1663
        %v1812 = vpop.f32.mrf.mxu0
        %v1813 = vadd.f32 0.0, %v1812
        %v1814 = vpop.f32.mrf.mxu0
        %v1815 = vadd.f32 0.0, %v1814
        %1816 = vmatmul.bf16.gmra.mxu0 %v1665
        %v1817 = vpop.f32.mrf.mxu0
        %v1818 = vadd.f32 0.0, %v1817
        %v1819 = vpop.f32.mrf.mxu0
        %v1820 = vadd.f32 0.0, %v1819
        %1821 = vmatmul.bf16.gmra.mxu0 %v1667
        %v1822 = vpop.f32.mrf.mxu0
        %v1823 = vadd.f32 0.0, %v1822
        %v1824 = vpop.f32.mrf.mxu0
        %v1825 = vadd.f32 0.0, %v1824
        %1826 = vmatmul.bf16.gmra.mxu0 %v1669
        %v1827 = vpop.f32.mrf.mxu0
        %v1828 = vadd.f32 0.0, %v1827
        %v1829 = vpop.f32.mrf.mxu0
        %v1830 = vadd.f32 0.0, %v1829
        %1831 = vdwg.mxu0
        %1832 = vmatpush.bf16.msra.mxu0 %v1766
        %1833 = vmatpush.bf16.msra.mxu0 %v1765
        %1834 = vmatpush.bf16.msra.mxu0 %v1764
        %1835 = vmatpush.bf16.msra.mxu0 %v1763
        %1836 = vmatpush.bf16.msra.mxu0 %v1762
        %1837 = vmatpush.bf16.msra.mxu0 %v1761
        %1838 = vmatpush.bf16.msra.mxu0 %v1760
        %1839 = vmatpush.bf16.msra.mxu0 %v1759
        %1840 = vmatmul.bf16.gmra.mxu0 %v1656
        %v1841 = vpop.f32.mrf.mxu0
        %v1842 = vadd.f32 %v1793, %v1841
        %v1843 = vpop.f32.mrf.mxu0
        %v1844 = vadd.f32 %v1795, %v1843
        %1845 = vmatmul.bf16.gmra.mxu0 %v1658
        %v1846 = vpop.f32.mrf.mxu0
        %v1847 = vadd.f32 %v1798, %v1846
        %v1848 = vpop.f32.mrf.mxu0
        %v1849 = vadd.f32 %v1800, %v1848
        %1850 = vmatmul.bf16.gmra.mxu0 %v1660
        %v1851 = vpop.f32.mrf.mxu0
        %v1852 = vadd.f32 %v1803, %v1851
        %v1853 = vpop.f32.mrf.mxu0
        %v1854 = vadd.f32 %v1805, %v1853
        %1855 = vmatmul.bf16.gmra.mxu0 %v1662
        %v1856 = vpop.f32.mrf.mxu0
        %v1857 = vadd.f32 %v1808, %v1856
        %v1858 = vpop.f32.mrf.mxu0
        %v1859 = vadd.f32 %v1810, %v1858
        %1860 = vmatmul.bf16.gmra.mxu0 %v1664
        %v1861 = vpop.f32.mrf.mxu0
        %v1862 = vadd.f32 %v1813, %v1861
        %v1863 = vpop.f32.mrf.mxu0
        %v1864 = vadd.f32 %v1815, %v1863
        %1865 = vmatmul.bf16.gmra.mxu0 %v1666
        %v1866 = vpop.f32.mrf.mxu0
        %v1867 = vadd.f32 %v1818, %v1866
        %v1868 = vpop.f32.mrf.mxu0
        %v1869 = vadd.f32 %v1820, %v1868
        %1870 = vmatmul.bf16.gmra.mxu0 %v1668
        %v1871 = vpop.f32.mrf.mxu0
        %v1872 = vadd.f32 %v1823, %v1871
        %v1873 = vpop.f32.mrf.mxu0
        %v1874 = vadd.f32 %v1825, %v1873
        %1875 = vmatmul.bf16.gmra.mxu0 %v1670
        %v1876 = vpop.f32.mrf.mxu0
        %v1877 = vadd.f32 %v1828, %v1876
        %v1878 = vpop.f32.mrf.mxu0
        %v1879 = vadd.f32 %v1830, %v1878
        %1880 = vdwg.mxu0
        %s1881 = smul.u32 %s25, 128
        %s1882 = sshra.s32 %s1881, 7
        %s1883 = sand.u32 %s1881, 127
        %s1884 = smul.addr %s1882, 8
        %s1885 = scalar_lea.vmem %s6, %s1884
        %v1886 = vld [vmem:[%s1885] ss:$0 sm:$0xff]
        %v1887 = vld [vmem:[%s1885 + $0x1] ss:$0 sm:$0xff]
        %v1888 = vadd.f32 %v1842, %v1844
        %v1889 = vadd.f32 %v1888, %v1847
        %v1890 = vadd.f32 %v1889, %v1849
        %v1891 = vadd.f32 %v1890, %v1852
        %v1892 = vadd.f32 %v1891, %v1854
        %v1893 = vadd.f32 %v1892, %v1857
        %v1894 = vadd.f32 %v1893, %v1859
        %v1895 = vadd.f32 %v1894, %v1862
        %v1896 = vadd.f32 %v1895, %v1864
        %v1897 = vadd.f32 %v1896, %v1867
        %v1898 = vadd.f32 %v1897, %v1869
        %v1899 = vadd.f32 %v1898, %v1872
        %v1900 = vadd.f32 %v1899, %v1874
        %v1901 = vadd.f32 %v1900, %v1877
        %v1902 = vadd.f32 %v1901, %v1879
        %v1903 = vrot.slane %v1902, 4
        %v1904 = vadd.f32 %v1902, %v1903
        %v1905 = vrot.slane %v1904, 2
        %v1906 = vadd.f32 %v1904, %v1905
        %v1907 = vrot.slane %v1906, 1
        %v1908 = vadd.f32 %v1906, %v1907
        %v1909 = vrcp.pop 128.0
        %v1910 = vmul.f32 128.0, %v1909
        %v1911 = vsub.f32 1.0, %v1910
        %v1912 = vmul.f32 %v1909, %v1911
        %v1913 = vadd.f32 %v1909, %v1912
        %vm1914 = vweird.f32 %v1909
        %v1915 = vsel %vm1914, %v1909, %v1913
        %v1916 = vmul.f32 %v1908, %v1915
        %v1917 = vmul.f32 %v1842, %v1842
        %v1918 = vmul.f32 %v1844, %v1844
        %v1919 = vmul.f32 %v1847, %v1847
        %v1920 = vmul.f32 %v1849, %v1849
        %v1921 = vmul.f32 %v1852, %v1852
        %v1922 = vmul.f32 %v1854, %v1854
        %v1923 = vmul.f32 %v1857, %v1857
        %v1924 = vmul.f32 %v1859, %v1859
        %v1925 = vmul.f32 %v1862, %v1862
        %v1926 = vmul.f32 %v1864, %v1864
        %v1927 = vmul.f32 %v1867, %v1867
        %v1928 = vmul.f32 %v1869, %v1869
        %v1929 = vmul.f32 %v1872, %v1872
        %v1930 = vmul.f32 %v1874, %v1874
        %v1931 = vmul.f32 %v1877, %v1877
        %v1932 = vmul.f32 %v1879, %v1879
        %v1933 = vadd.f32 %v1917, %v1918
        %v1934 = vadd.f32 %v1933, %v1919
        %v1935 = vadd.f32 %v1934, %v1920
        %v1936 = vadd.f32 %v1935, %v1921
        %v1937 = vadd.f32 %v1936, %v1922
        %v1938 = vadd.f32 %v1937, %v1923
        %v1939 = vadd.f32 %v1938, %v1924
        %v1940 = vadd.f32 %v1939, %v1925
        %v1941 = vadd.f32 %v1940, %v1926
        %v1942 = vadd.f32 %v1941, %v1927
        %v1943 = vadd.f32 %v1942, %v1928
        %v1944 = vadd.f32 %v1943, %v1929
        %v1945 = vadd.f32 %v1944, %v1930
        %v1946 = vadd.f32 %v1945, %v1931
        %v1947 = vadd.f32 %v1946, %v1932
        %v1948 = vrot.slane %v1947, 4
        %v1949 = vadd.f32 %v1947, %v1948
        %v1950 = vrot.slane %v1949, 2
        %v1951 = vadd.f32 %v1949, %v1950
        %v1952 = vrot.slane %v1951, 1
        %v1953 = vadd.f32 %v1951, %v1952
        %v1954 = vmul.f32 %v1953, %v1915
        %v1955 = vmul.f32 %v1916, %v1916
        %v1956 = vsub.f32 %v1954, %v1955
        %v1957 = vmax.f32 %v1956, 0.0
        %v1958 = vadd.f32 %v1957, 1e-05
        %v1959 = vrsqrt.pop %v1958
        %v1960 = vmul.f32 %v1959, %v1958
        %v1961 = vmul.f32 %v1960, %v1959
        %v1962 = vmul.f32 0.5, %v1961
        %v1963 = vsub.f32 1.5, %v1962
        %v1964 = vmul.f32 %v1959, %v1963
        %vm1965 = vweird.f32 %v1958
        %vm1966 = vweird.f32 %v1959
        %vm1967 = vmor %vm1965, %vm1966
        %v1968 = vsel %vm1967, %v1959, %v1964
        %v1969 = vmul.f32 %v1968, %v1886
        %v1970 = vmul.f32 %v1916, %v1969
        %v1971 = vsub.f32 %v1887, %v1970
        %v1972 = vmul.f32 %v1842, %v1969
        %v1973 = vmul.f32 %v1844, %v1969
        %v1974 = vmul.f32 %v1847, %v1969
        %v1975 = vmul.f32 %v1849, %v1969
        %v1976 = vmul.f32 %v1852, %v1969
        %v1977 = vmul.f32 %v1854, %v1969
        %v1978 = vmul.f32 %v1857, %v1969
        %v1979 = vmul.f32 %v1859, %v1969
        %v1980 = vmul.f32 %v1862, %v1969
        %v1981 = vmul.f32 %v1864, %v1969
        %v1982 = vmul.f32 %v1867, %v1969
        %v1983 = vmul.f32 %v1869, %v1969
        %v1984 = vmul.f32 %v1872, %v1969
        %v1985 = vmul.f32 %v1874, %v1969
        %v1986 = vmul.f32 %v1877, %v1969
        %v1987 = vmul.f32 %v1879, %v1969
        %v1988 = vadd.f32 %v1972, %v1971
        %v1989 = vadd.f32 %v1973, %v1971
        %v1990 = vadd.f32 %v1974, %v1971
        %v1991 = vadd.f32 %v1975, %v1971
        %v1992 = vadd.f32 %v1976, %v1971
        %v1993 = vadd.f32 %v1977, %v1971
        %v1994 = vadd.f32 %v1978, %v1971
        %v1995 = vadd.f32 %v1979, %v1971
        %v1996 = vadd.f32 %v1980, %v1971
        %v1997 = vadd.f32 %v1981, %v1971
        %v1998 = vadd.f32 %v1982, %v1971
        %v1999 = vadd.f32 %v1983, %v1971
        %v2000 = vadd.f32 %v1984, %v1971
        %v2001 = vadd.f32 %v1985, %v1971
        %v2002 = vadd.f32 %v1986, %v1971
        %v2003 = vadd.f32 %v1987, %v1971
        %2004 = vst [vmem:[%s314] sm:$0xff] %v1988
        %2005 = vst [vmem:[%s314 + $0x8] sm:$0xff] %v1989
        %2006 = vst [vmem:[%s314 + $0x10] sm:$0xff] %v1990
        %2007 = vst [vmem:[%s314 + $0x18] sm:$0xff] %v1991
        %2008 = vst [vmem:[%s314 + $0x20] sm:$0xff] %v1992
        %2009 = vst [vmem:[%s314 + $0x28] sm:$0xff] %v1993
        %2010 = vst [vmem:[%s314 + $0x30] sm:$0xff] %v1994
        %2011 = vst [vmem:[%s314 + $0x38] sm:$0xff] %v1995
        %2012 = vst [vmem:[%s314 + $0x40] sm:$0xff] %v1996
        %2013 = vst [vmem:[%s314 + $0x48] sm:$0xff] %v1997
        %2014 = vst [vmem:[%s314 + $0x50] sm:$0xff] %v1998
        %2015 = vst [vmem:[%s314 + $0x58] sm:$0xff] %v1999
        %2016 = vst [vmem:[%s314 + $0x60] sm:$0xff] %v2000
        %2017 = vst [vmem:[%s314 + $0x68] sm:$0xff] %v2001
        %2018 = vst [vmem:[%s314 + $0x70] sm:$0xff] %v2002
        %2019 = vst [vmem:[%s314 + $0x78] sm:$0xff] %v2003
        %s2020 = sand.u32 %s185, 1
        %s2021 = scalar_lea.sflag [#allocation5], %s2020
        %s2022 = sand.u32 %s185, 1
        %s2023 = smul.addr %s2022, 128
        %s2024 = scalar_lea.vmem [#allocation8], %s2023
        // Predicated region
        $region61: #{projection_forward.1} parent=47 // pred_check
          %p2025 = pneg %p195
        $region62: #{projection_forward.1} parent=47 // pred_check_branch
          %2027 = sbr.rel (%p2025) target = $region64
        $region63: #{projection_forward.1} parent=47 // pred_region
          %2029 = vsyncadd %s2021, 0
          %s2030 = smul.addr %s25, 8
          %s2031 = scalar_lea.hbm %s7, %s2030
          %s2032 = sshll.u32 %s2024, 4
          %s2033 = int_to_ptr.vmem [resolvable:$true] %s2032
          %s2034 = sshll.u32 %s2031, 4
          %s2035 = int_to_ptr.hbm [resolvable:$true] %s2034
          %2040 = dma.vmem_to_hbm [thread:$0]  %s2033, 2048, %s2035, %s2021, 128, 256, 8
        $region64: #{projection_forward.1} parent=47 // pred_fallthru
          _
      $region48: #{projection_forward.1} parent=5 // pred_fallthru
        _
      %p2041 = scmp.le.s32.totalorder 2, %s20
      // Predicated region
      $region65: #{projection_forward.1} parent=5 // pred_check
        %p2042 = pneg %p2041
      $region66: #{projection_forward.1} parent=5 // pred_check_branch
        %2044 = sbr.rel (%p2042) target = $region68
      $region67: #{projection_forward.1} parent=5 // pred_region
        %s2045 = ssub.s32 %s20, 2
        // Predicated region
        $region69: #{projection_forward.1} parent=67 // pred_check
          %p2046 = pneg %p201
        $region70: #{projection_forward.1} parent=67 // pred_check_branch
          %2048 = sbr.rel (%p2046) target = $region72
        $region71: #{projection_forward.1} parent=67 // pred_region
          %s2049 = sand.u32 %s186, 1
          %s2050 = scalar_lea.sflag [#allocation5], %s2049
          %s2051 = sand.u32 %s186, 1
          %s2052 = smul.addr %s2051, 128
          %s2053 = scalar_lea.vmem [#allocation8], %s2052
          %2055 = dma.done %s2050, 2048
        $region72: #{projection_forward.1} parent=67 // pred_fallthru
          _
      $region68: #{projection_forward.1} parent=5 // pred_fallthru
        _
    $region6: #{projection_forward.1} parent=1 // loop_footer
      %s24 = sadd.s32 1, %s20
    $region7: #{projection_forward.1} parent=1 // loop_footer_branch
      %19 = sbr.rel target = $region3
    $region8: #{projection_forward.1} parent=1 // loop_exit
      _
    %2056 = vsyncpa [#allocation4], 1
    %s2057 = scalar_lea.sflag [#allocation4], 1
    %2058 = vsyncpa %s2057, 1
    %2059 = vsyncpa [#allocation7], 1
    %s2060 = scalar_lea.sflag [#allocation7], 1
    %2061 = vsyncpa %s2060, 1
    %2062 = vsyncpa [#allocation5], 1
    %s2063 = scalar_lea.sflag [#allocation5], 1
    %2064 = vsyncpa %s2063, 1

</llo_original>
